<compile_context>
chip_gen: v7x
topology: tpu7x:2x2x1
jax: 0.10.0
libtpu: 0.0.40
codegen_flags: <defaults>
</compile_context>

<pallas_src>
import jax
import jax.numpy as jnp
from jax.experimental import pallas as pl
from jax.experimental.pallas import tpu as pltpu

C_LMS = 31          # lms / ms channels
C_RGB = 3           # rgb channels
C_XT = C_LMS + C_RGB   # 34
EMBED = 48          # embed_dim of Merge
SCALE = 8           # SR x8
_TM_TARGET = 16384  # target pixels per grid step (~3 MiB per (48, TM) f32 temp)


def _rows_per_step(HS, B, W):
    """Low-res rows per grid step: largest divisor of HS with ~_TM_TARGET px."""
    target = max(1, _TM_TARGET // (SCALE * W))
    r_best = 1
    for r in range(1, min(HS, target) + 1):
        if HS % r == 0:
            r_best = r
    # Keep >= 2 total grid steps when possible so both v7x TensorCores get work.
    if B * (HS // r_best) < 2:
        for r in range(r_best - 1, 0, -1):
            if HS % r == 0 and HS // r >= 2:
                r_best = r
                break
    return r_best


def _merge_kernel(lms_ref, rgb_ref, ms_ref, u_ref,
                  w1a_ref, w1b_ref, w2_ref, w3_ref, o_ref):
    # lms_ref: (31, TM)   rgb_ref: (3, TM)    ms_ref: (R, 31, WS)
    # u_ref:   (WS, W)    w1a: (48, 31)  w1b: (48, 3)  w2: (48, 31)  w3: (31, 48)
    # o_ref:   (31, TM)   with TM = R * 8 * W
    r_rows = ms_ref.shape[0]

    # xt @ W1  ==  W1a^T @ lms + W1b^T @ rgb   (34-channel concat never built).
    # Operands stay in the compute dtype (bf16 in the demo); f32 accumulation.
    h = jnp.dot(w1a_ref[...], lms_ref[...], preferred_element_type=jnp.float32)
    h = h + jnp.dot(w1b_ref[...], rgb_ref[...], preferred_element_type=jnp.float32)

    # Low-res ms path: project each low-res row to embed_dim, x8 upsample along
    # width with a tiny (WS, W) 0/1 matmul, then x8 along height by lane-tiling
    # (pixel tile is row-major, so period-W tiling == row repeat).
    parts = []
    for r in range(r_rows):
        msp = jnp.dot(w2_ref[...], ms_ref[r],
                      preferred_element_type=jnp.float32).astype(u_ref.dtype)
        msw = jnp.dot(msp, u_ref[...], preferred_element_type=jnp.float32)
        parts.append(jnp.tile(msw, (1, SCALE)))            # (48, 8*W)
    ms_up = parts[0] if r_rows == 1 else jnp.concatenate(parts, axis=1)
    h = h + ms_up                                            # (48, TM) f32

    # TODO(synk): PyTorch nn.GELU() defaults to the exact erf form; the tanh
    # approximation is used here (Merge internals are a stand-in anyway).
    # GELU runs in the compute dtype to halve VMEM temporaries / VALU traffic.
    act = jax.nn.gelu(h.astype(w3_ref.dtype), approximate=True)

    out = jnp.dot(w3_ref[...], act, preferred_element_type=jnp.float32)  # (31, TM)
    # Residual add in f32, single rounding at the store (output = input dtype).
    o_ref[...] = (out + lms_ref[...].astype(jnp.float32)).astype(o_ref.dtype)


@jax.jit
def bidinet_forward(rgb, lms, ms, w1, w2, w3):
    """rgb: (B,3,H,W)  lms: (B,31,H,W)  ms: (B,31,H/8,W/8)  ->  (B,31,H,W)."""
    B, _, H, W = lms.shape
    HS, WS = H // SCALE, W // SCALE

    assert H % SCALE == 0 and W % SCALE == 0
    assert W % 16 == 0, "8*W must be a multiple of 128 (i.e. W % 16 == 0)"
    assert rgb.shape == (B, C_RGB, H, W)
    assert ms.shape == (B, C_LMS, HS, WS)
    assert w1.shape == (C_XT, EMBED) and w2.shape == (C_LMS, EMBED)
    assert w3.shape == (EMBED, C_LMS)

    cdt = lms.dtype                      # compute / output dtype (bf16 in demo)
    R = _rows_per_step(HS, B, W)         # low-res rows per grid step
    TM = R * SCALE * W                   # pixels per grid step
    assert TM % 128 == 0

    # Pure reshapes of the full-res tensors (no transposes, no extra HBM pass).
    lms2 = lms.reshape(B, C_LMS, H * W)
    rgb2 = rgb.reshape(B, C_RGB, H * W)
    # ms is 64x smaller; reorder so one grid step grabs R low-res rows (R,31,WS).
    ms2 = jnp.transpose(ms, (0, 2, 1, 3))                    # (B, HS, 31, WS)

    # Constant 0/1 width-upsample operator: U[j, w] = 1 iff w // 8 == j.
    cols = jnp.arange(W) // SCALE
    u_small = (jnp.arange(WS)[:, None] == cols[None, :]).astype(cdt)   # (WS, W)

    # Weights in the compute dtype, channel-major; w1 split to avoid the concat.
    w1c = w1.astype(cdt)
    w1a_t = w1c[:C_LMS].T                                    # (48, 31)
    w1b_t = w1c[C_LMS:].T                                    # (48, 3)
    w2_t = w2.astype(cdt).T                                  # (48, 31)
    w3_t = w3.astype(cdt).T                                  # (31, 48)

    grid = (B, HS // R)

    def pix_spec(c):
        return pl.BlockSpec((None, c, TM), lambda b, i: (b, 0, i))

    def full_spec(*shape):
        nd = len(shape)
        return pl.BlockSpec(shape, lambda b, i: (0,) * nd)

    out_flat = pl.pallas_call(
        _merge_kernel,
        out_shape=jax.ShapeDtypeStruct((B, C_LMS, H * W), cdt),
        grid=grid,
        in_specs=[
            pix_spec(C_LMS),                                             # lms
            pix_spec(C_RGB),                                             # rgb
            pl.BlockSpec((None, R, C_LMS, WS), lambda b, i: (b, i, 0, 0)),  # ms
            full_spec(WS, W),                                            # upsample op
            full_spec(EMBED, C_LMS),                                     # w1a^T
            full_spec(EMBED, C_RGB),                                     # w1b^T
            full_spec(EMBED, C_LMS),                                     # w2^T
            full_spec(C_LMS, EMBED),                                     # w3^T
        ],
        out_specs=pix_spec(C_LMS),
        compiler_params=pltpu.CompilerParams(
            dimension_semantics=("parallel", "parallel"),
            vmem_limit_bytes=40 * 1024 * 1024),
    )(lms2, rgb2, ms2, u_small, w1a_t, w1b_t, w2_t, w3_t)

    return out_flat.reshape(B, C_LMS, H, W)


def init_params(key):
    # init_w: Linear weights ~ N(0, 0.01); Conv2d biases = 0 (Merge built with
    # bias=False, so biases are omitted).
    k1, k2, k3 = jax.random.split(key, 3)
    w1 = 0.01 * jax.random.normal(k1, (C_XT, EMBED), jnp.float32)
    w2 = 0.01 * jax.random.normal(k2, (C_LMS, EMBED), jnp.float32)
    w3 = 0.01 * jax.random.normal(k3, (EMBED, C_LMS), jnp.float32)
    return w1, w2, w3


def _reference(rgb, lms, ms, w1, w2, w3):
    """Pure-JAX f32 reference of the same fused stand-in forward."""
    f32 = jnp.float32
    xt = jnp.concatenate([lms, rgb], axis=1).astype(f32)
    msu = jnp.repeat(jnp.repeat(ms.astype(f32), SCALE, axis=2), SCALE, axis=3)
    h = jnp.einsum('bchw,ce->behw', xt, w1, preferred_element_type=f32)
    h = h + jnp.einsum('bchw,ce->behw', msu, w2, preferred_element_type=f32)
    h = jax.nn.gelu(h, approximate=True)
    out = jnp.einsum('behw,ec->bchw', h, w3, preferred_element_type=f32)
    return out + lms.astype(f32)


if __name__ == "__main__":
    key = jax.random.PRNGKey(0)
    kp, kr, kl, km = jax.random.split(key, 4)

    B, H, W = 2, 16, 16
    # Pixel streams fed as bf16 (halves HBM traffic); weights kept f32 in the
    # wrapper and cast to the compute dtype inside bidinet_forward.
    rgb = jax.random.normal(kr, (B, C_RGB, H, W), jnp.float32).astype(jnp.bfloat16)
    lms = jax.random.normal(kl, (B, C_LMS, H, W), jnp.float32).astype(jnp.bfloat16)
    ms = jax.random.normal(
        km, (B, C_LMS, H // SCALE, W // SCALE), jnp.float32).astype(jnp.bfloat16)

    w1, w2, w3 = init_params(kp)

    out = bidinet_forward(rgb, lms, ms, w1, w2, w3)
    jax.block_until_ready(out)
    assert out.shape == (B, C_LMS, H, W), out.shape
    assert out.dtype == lms.dtype, out.dtype

    ref = _reference(rgb, lms, ms, w1, w2, w3)
    out_f32 = out.astype(jnp.float32)
    # Relative tolerance: kernel uses bf16 operands + bf16 output rounding.
    err = float(jnp.max(jnp.abs(out_f32 - ref) / (1.0 + jnp.abs(ref))))
    assert err < 2e-2, f"max rel err {err}"
    print("KERNEL_OK")
</pallas_src>

<mosaic_0001>
module attributes {stable_mosaic.version = 11 : i64} {
  func.func @_merge_kernel(%arg0: i32, %arg1: i32, %arg2: memref<1x31x256xbf16, #tpu.memory_space<vmem>>, %arg3: memref<1x3x256xbf16, #tpu.memory_space<vmem>>, %arg4: memref<1x2x31x2xbf16, #tpu.memory_space<vmem>>, %arg5: memref<2x16xbf16, #tpu.memory_space<vmem>>, %arg6: memref<48x31xbf16, #tpu.memory_space<vmem>>, %arg7: memref<48x3xbf16, #tpu.memory_space<vmem>>, %arg8: memref<48x31xbf16, #tpu.memory_space<vmem>>, %arg9: memref<31x48xbf16, #tpu.memory_space<vmem>>, %arg10: memref<1x31x256xbf16, #tpu.memory_space<vmem>>) attributes {dimension_semantics = [#tpu.dimension_semantics<parallel>, #tpu.dimension_semantics<parallel>], iteration_bounds = array<i64: 2, 1>, scalar_prefetch = 0 : i64, scratch_operands = 0 : i64, tpu.core_type = #tpu.core_type<tc>, window_params = [{transform_indices = @transform_0, window_bounds = array<i64: 1, 31, 256>}, {transform_indices = @transform_1, window_bounds = array<i64: 1, 3, 256>}, {transform_indices = @transform_2, window_bounds = array<i64: 1, 2, 31, 2>}, {pipeline_mode = #tpu.pipeline_mode<synchronous>, transform_indices = @transform_3, window_bounds = array<i64: 2, 16>}, {pipeline_mode = #tpu.pipeline_mode<synchronous>, transform_indices = @transform_4, window_bounds = array<i64: 48, 31>}, {pipeline_mode = #tpu.pipeline_mode<synchronous>, transform_indices = @transform_5, window_bounds = array<i64: 48, 3>}, {pipeline_mode = #tpu.pipeline_mode<synchronous>, transform_indices = @transform_6, window_bounds = array<i64: 48, 31>}, {pipeline_mode = #tpu.pipeline_mode<synchronous>, transform_indices = @transform_7, window_bounds = array<i64: 31, 48>}, {transform_indices = @transform_8, window_bounds = array<i64: 1, 31, 256>}]} {
    %c0 = arith.constant 0 : index
    %c0_0 = arith.constant 0 : index
    %0 = vector.load %arg6[%c0, %c0_0] : memref<48x31xbf16, #tpu.memory_space<vmem>>, vector<48x31xbf16>
    %c0_1 = arith.constant 0 : index
    %c0_2 = arith.constant 0 : index
    %c0_3 = arith.constant 0 : index
    %1 = vector.load %arg2[%c0_1, %c0_2, %c0_3] : memref<1x31x256xbf16, #tpu.memory_space<vmem>>, vector<1x31x256xbf16>
    %2 = vector.shape_cast %1 : vector<1x31x256xbf16> to vector<31x256xbf16>
    %cst = arith.constant dense<0.000000e+00> : vector<48x256xf32>
    %3 = tpu.matmul %0, %2, %cst {dimension_numbers = #tpu.dot_dimension_numbers<[1], [0], [0], [1], [0, 0, 1, 1], [], []>} : vector<48x31xbf16>, vector<31x256xbf16>, vector<48x256xf32> -> vector<48x256xf32>
    %c0_4 = arith.constant 0 : index
    %c0_5 = arith.constant 0 : index
    %4 = vector.load %arg7[%c0_4, %c0_5] : memref<48x3xbf16, #tpu.memory_space<vmem>>, vector<48x3xbf16>
    %c0_6 = arith.constant 0 : index
    %c0_7 = arith.constant 0 : index
    %c0_8 = arith.constant 0 : index
    %5 = vector.load %arg3[%c0_6, %c0_7, %c0_8] : memref<1x3x256xbf16, #tpu.memory_space<vmem>>, vector<1x3x256xbf16>
    %6 = vector.shape_cast %5 : vector<1x3x256xbf16> to vector<3x256xbf16>
    %cst_9 = arith.constant dense<0.000000e+00> : vector<48x256xf32>
    %7 = tpu.matmul %4, %6, %cst_9 {dimension_numbers = #tpu.dot_dimension_numbers<[1], [0], [0], [1], [0, 0, 1, 1], [], []>} : vector<48x3xbf16>, vector<3x256xbf16>, vector<48x256xf32> -> vector<48x256xf32>
    %8 = arith.addf %3, %7 : vector<48x256xf32>
    %c0_10 = arith.constant 0 : index
    %c0_11 = arith.constant 0 : index
    %9 = vector.load %arg8[%c0_10, %c0_11] : memref<48x31xbf16, #tpu.memory_space<vmem>>, vector<48x31xbf16>
    %c0_12 = arith.constant 0 : index
    %c0_13 = arith.constant 0 : index
    %c0_14 = arith.constant 0 : index
    %c0_15 = arith.constant 0 : index
    %10 = vector.load %arg4[%c0_12, %c0_13, %c0_14, %c0_15] : memref<1x2x31x2xbf16, #tpu.memory_space<vmem>>, vector<1x1x31x2xbf16>
    %11 = vector.shape_cast %10 : vector<1x1x31x2xbf16> to vector<31x2xbf16>
    %cst_16 = arith.constant dense<0.000000e+00> : vector<48x2xf32>
    %12 = tpu.matmul %9, %11, %cst_16 {dimension_numbers = #tpu.dot_dimension_numbers<[1], [0], [0], [1], [0, 0, 1, 1], [], []>} : vector<48x31xbf16>, vector<31x2xbf16>, vector<48x2xf32> -> vector<48x2xf32>
    %13 = arith.truncf %12 : vector<48x2xf32> to vector<48x2xbf16>
    %c0_17 = arith.constant 0 : index
    %c0_18 = arith.constant 0 : index
    %14 = vector.load %arg5[%c0_17, %c0_18] : memref<2x16xbf16, #tpu.memory_space<vmem>>, vector<2x16xbf16>
    %cst_19 = arith.constant dense<0.000000e+00> : vector<48x16xf32>
    %15 = tpu.matmul %13, %14, %cst_19 {dimension_numbers = #tpu.dot_dimension_numbers<[1], [0], [0], [1], [0, 0, 1, 1], [], []>} : vector<48x2xbf16>, vector<2x16xbf16>, vector<48x16xf32> -> vector<48x16xf32>
    %16 = tpu.concatenate %15, %15, %15, %15, %15, %15, %15, %15 in 1 : vector<48x16xf32>, vector<48x16xf32>, vector<48x16xf32>, vector<48x16xf32>, vector<48x16xf32>, vector<48x16xf32>, vector<48x16xf32>, vector<48x16xf32> -> vector<48x128xf32>
    %c0_20 = arith.constant 0 : index
    %c0_21 = arith.constant 0 : index
    %17 = vector.load %arg8[%c0_20, %c0_21] : memref<48x31xbf16, #tpu.memory_space<vmem>>, vector<48x31xbf16>
    %c0_22 = arith.constant 0 : index
    %c1 = arith.constant 1 : index
    %c0_23 = arith.constant 0 : index
    %c0_24 = arith.constant 0 : index
    %18 = vector.load %arg4[%c0_22, %c1, %c0_23, %c0_24] : memref<1x2x31x2xbf16, #tpu.memory_space<vmem>>, vector<1x1x31x2xbf16>
    %19 = vector.shape_cast %18 : vector<1x1x31x2xbf16> to vector<31x2xbf16>
    %cst_25 = arith.constant dense<0.000000e+00> : vector<48x2xf32>
    %20 = tpu.matmul %17, %19, %cst_25 {dimension_numbers = #tpu.dot_dimension_numbers<[1], [0], [0], [1], [0, 0, 1, 1], [], []>} : vector<48x31xbf16>, vector<31x2xbf16>, vector<48x2xf32> -> vector<48x2xf32>
    %21 = arith.truncf %20 : vector<48x2xf32> to vector<48x2xbf16>
    %c0_26 = arith.constant 0 : index
    %c0_27 = arith.constant 0 : index
    %22 = vector.load %arg5[%c0_26, %c0_27] : memref<2x16xbf16, #tpu.memory_space<vmem>>, vector<2x16xbf16>
    %cst_28 = arith.constant dense<0.000000e+00> : vector<48x16xf32>
    %23 = tpu.matmul %21, %22, %cst_28 {dimension_numbers = #tpu.dot_dimension_numbers<[1], [0], [0], [1], [0, 0, 1, 1], [], []>} : vector<48x2xbf16>, vector<2x16xbf16>, vector<48x16xf32> -> vector<48x16xf32>
    %24 = tpu.concatenate %23, %23, %23, %23, %23, %23, %23, %23 in 1 : vector<48x16xf32>, vector<48x16xf32>, vector<48x16xf32>, vector<48x16xf32>, vector<48x16xf32>, vector<48x16xf32>, vector<48x16xf32>, vector<48x16xf32> -> vector<48x128xf32>
    %25 = tpu.concatenate %16, %24 in 1 : vector<48x128xf32>, vector<48x128xf32> -> vector<48x256xf32>
    %26 = arith.addf %8, %25 : vector<48x256xf32>
    %27 = arith.truncf %26 : vector<48x256xf32> to vector<48x256xbf16>
    %28 = arith.mulf %27, %27 : vector<48x256xbf16>
    %29 = arith.mulf %27, %28 : vector<48x256xbf16>
    %cst_29 = arith.constant 4.467770e-02 : bf16
    %30 = vector.broadcast %cst_29 : bf16 to vector<48x256xbf16>
    %31 = arith.mulf %30, %29 : vector<48x256xbf16>
    %32 = arith.addf %27, %31 : vector<48x256xbf16>
    %cst_30 = arith.constant 7.968750e-01 : bf16
    %33 = vector.broadcast %cst_30 : bf16 to vector<48x256xbf16>
    %34 = arith.mulf %33, %32 : vector<48x256xbf16>
    %35 = math.tanh %34 : vector<48x256xbf16>
    %cst_31 = arith.constant 1.000000e+00 : bf16
    %36 = vector.broadcast %cst_31 : bf16 to vector<48x256xbf16>
    %37 = arith.addf %36, %35 : vector<48x256xbf16>
    %cst_32 = arith.constant 5.000000e-01 : bf16
    %38 = vector.broadcast %cst_32 : bf16 to vector<48x256xbf16>
    %39 = arith.mulf %38, %37 : vector<48x256xbf16>
    %40 = arith.mulf %27, %39 : vector<48x256xbf16>
    %c0_33 = arith.constant 0 : index
    %c0_34 = arith.constant 0 : index
    %41 = vector.load %arg9[%c0_33, %c0_34] : memref<31x48xbf16, #tpu.memory_space<vmem>>, vector<31x48xbf16>
    %cst_35 = arith.constant dense<0.000000e+00> : vector<31x256xf32>
    %42 = tpu.matmul %41, %40, %cst_35 {dimension_numbers = #tpu.dot_dimension_numbers<[1], [0], [0], [1], [0, 0, 1, 1], [], []>} : vector<31x48xbf16>, vector<48x256xbf16>, vector<31x256xf32> -> vector<31x256xf32>
    %c0_36 = arith.constant 0 : index
    %c0_37 = arith.constant 0 : index
    %c0_38 = arith.constant 0 : index
    %43 = vector.load %arg2[%c0_36, %c0_37, %c0_38] : memref<1x31x256xbf16, #tpu.memory_space<vmem>>, vector<1x31x256xbf16>
    %44 = vector.shape_cast %43 : vector<1x31x256xbf16> to vector<31x256xbf16>
    %45 = arith.extf %44 : vector<31x256xbf16> to vector<31x256xf32>
    %46 = arith.addf %42, %45 : vector<31x256xf32>
    %47 = arith.truncf %46 : vector<31x256xf32> to vector<31x256xbf16>
    %c0_39 = arith.constant 0 : index
    %c0_40 = arith.constant 0 : index
    %c0_41 = arith.constant 0 : index
    %48 = vector.load %arg10[%c0_39, %c0_40, %c0_41] : memref<1x31x256xbf16, #tpu.memory_space<vmem>>, vector<1x31x256xbf16>
    %49 = vector.shape_cast %48 : vector<1x31x256xbf16> to vector<31x256xbf16>
    %50 = vector.shape_cast %47 : vector<31x256xbf16> to vector<1x31x256xbf16>
    tpu.vector_store %arg10[%c0_39, %c0_40, %c0_41], %50 {strides = array<i32>} : memref<1x31x256xbf16, #tpu.memory_space<vmem>>, vector<1x31x256xbf16>,
    return
  }
  func.func @transform_0(%arg0: i32, %arg1: i32) -> (i32, i32, i32) {
    %c0_i32 = arith.constant 0 : i32
    %c0_i32_0 = arith.constant 0 : i32
    return %arg0, %c0_i32, %arg1 : i32, i32, i32
  }
  func.func @transform_1(%arg0: i32, %arg1: i32) -> (i32, i32, i32) {
    %c0_i32 = arith.constant 0 : i32
    %c0_i32_0 = arith.constant 0 : i32
    return %arg0, %c0_i32, %arg1 : i32, i32, i32
  }
  func.func @transform_2(%arg0: i32, %arg1: i32) -> (i32, i32, i32, i32) {
    %c0_i32 = arith.constant 0 : i32
    %c0_i32_0 = arith.constant 0 : i32
    %c0_i32_1 = arith.constant 0 : i32
    return %arg0, %arg1, %c0_i32, %c0_i32_0 : i32, i32, i32, i32
  }
  func.func @transform_3(%arg0: i32, %arg1: i32) -> (i32, i32) {
    %c0_i32 = arith.constant 0 : i32
    %c0_i32_0 = arith.constant 0 : i32
    %c0_i32_1 = arith.constant 0 : i32
    return %c0_i32, %c0_i32_0 : i32, i32
  }
  func.func @transform_4(%arg0: i32, %arg1: i32) -> (i32, i32) {
    %c0_i32 = arith.constant 0 : i32
    %c0_i32_0 = arith.constant 0 : i32
    %c0_i32_1 = arith.constant 0 : i32
    return %c0_i32, %c0_i32_0 : i32, i32
  }
  func.func @transform_5(%arg0: i32, %arg1: i32) -> (i32, i32) {
    %c0_i32 = arith.constant 0 : i32
    %c0_i32_0 = arith.constant 0 : i32
    %c0_i32_1 = arith.constant 0 : i32
    return %c0_i32, %c0_i32_0 : i32, i32
  }
  func.func @transform_6(%arg0: i32, %arg1: i32) -> (i32, i32) {
    %c0_i32 = arith.constant 0 : i32
    %c0_i32_0 = arith.constant 0 : i32
    %c0_i32_1 = arith.constant 0 : i32
    return %c0_i32, %c0_i32_0 : i32, i32
  }
  func.func @transform_7(%arg0: i32, %arg1: i32) -> (i32, i32) {
    %c0_i32 = arith.constant 0 : i32
    %c0_i32_0 = arith.constant 0 : i32
    %c0_i32_1 = arith.constant 0 : i32
    return %c0_i32, %c0_i32_0 : i32, i32
  }
  func.func @transform_8(%arg0: i32, %arg1: i32) -> (i32, i32, i32) {
    %c0_i32 = arith.constant 0 : i32
    %c0_i32_0 = arith.constant 0 : i32
    return %arg0, %c0_i32, %arg1 : i32, i32, i32
  }
}

</mosaic_0001>

<llo_original>
// kernel: bidinet_forward.1
$region0: #{bidinet_forward.1}
  #allocation0 [shape = 'u32[]', space=smem, size = 0x4, offset = 0x4, fixed_abs, tag = 'smem constant byte address 0x4 - core index']
  #allocation1 [shape = 'u32[144,128]{1,0:T(1,128)}', space=vmem, size = 0x12000, scoped, tag = 'internal scratch']
  %s0 = inlined_call_operand.vmem [shape: bf16[2,31,256], index: 0, kind: input, shape index: {}]
  %s1 = inlined_call_operand.vmem [shape: bf16[2,3,256], index: 1, kind: input, shape index: {}]
  %s2 = inlined_call_operand.vmem [shape: bf16[2,2,31,2], index: 2, kind: input, shape index: {}]
  %s3 = inlined_call_operand.vmem [shape: bf16[2,16], index: 3, kind: input, shape index: {}]
  %s4 = inlined_call_operand.vmem [shape: bf16[48,31], index: 4, kind: input, shape index: {}]
  %s5 = inlined_call_operand.vmem [shape: bf16[48,3], index: 5, kind: input, shape index: {}]
  %s6 = inlined_call_operand.vmem [shape: bf16[48,31], index: 6, kind: input, shape index: {}]
  %s7 = inlined_call_operand.vmem [shape: bf16[31,48], index: 7, kind: input, shape index: {}]
  %s8 = inlined_call_operand.vmem [shape: bf16[2,31,256], index: 8, kind: output, shape index: {}]
  %s9 = sld [smem:[#allocation0]]
  $region65: #{bidinet_forward.1} parent=0
    _
  %s11 = ssub.s32 1, %s9
  %s12 = scalar_select 0, %s11, %s9
  loop: start=0, step=1, limit=4
  $region2: #{bidinet_forward.1} parent=0 // loop_pre_header
    _
  $region3: #{bidinet_forward.1} parent=0 // loop_header
    %s14 = sphi 0, %s18
    %p15 = scmp.ge.s32.totalorder %s14, 4
    %s21 = sphi 0, %s33
    %s22 = sphi 0, %s29
    %s23 = sphi 0, %s21
    %s24 = sphi 0, %s22
    %s25 = sphi 0, %s23
    %s26 = sphi 0, %s24
    %s38 = sphi 0, %s40
    %s41 = sphi 0, %s38
    %s42 = sphi 0, %s41
    %s58 = sphi 0, %s42
    %s66 = sphi 0, %s68
    %s69 = sphi 0, %s66
    %s70 = sphi 0, %s69
    %s86 = sphi 0, %s70
    %s94 = sphi 0, %s96
    %s97 = sphi 0, %s94
    %s98 = sphi 0, %s97
    %s114 = sphi 0, %s98
    %s118 = sphi 0, %s118
    %s120 = sphi 0, %s118
    %s121 = sphi 0, %s120
    %s135 = sphi 0, %s121
    %s139 = sphi 0, %s139
    %s141 = sphi 0, %s139
    %s142 = sphi 0, %s141
    %s156 = sphi 0, %s142
    %s160 = sphi 0, %s160
    %s162 = sphi 0, %s160
    %s163 = sphi 0, %s162
    %s177 = sphi 0, %s163
    %s181 = sphi 0, %s181
    %s183 = sphi 0, %s181
    %s184 = sphi 0, %s183
    %s198 = sphi 0, %s184
    %s202 = sphi 0, %s202
    %s204 = sphi 0, %s202
    %s205 = sphi 0, %s204
    %s219 = sphi 0, %s205
    %s227 = sphi 0, %s229
    %s230 = sphi 0, %s227
    %s231 = sphi 0, %s230
    %s247 = sphi 0, %s231
  $region4: #{bidinet_forward.1} parent=0 // loop_header_branch
    %17 = sbr.rel (%p15) target = $region8
  $region5: #{bidinet_forward.1} parent=0 // loop_body
    %s19 = ssub.s32 %s14, 1
    %s20 = ssub.s32 %s14, 2
    %s27 = sadd.s32 1, %s22
    %p28 = scmp.ge.s32.totalorder %s27, 1
    %s29 = scalar_select %p28, 0, %s27
    %s30 = sadd.s32 1, %s21
    %s31 = scalar_select %p28, %s30, %s21
    %p32 = scmp.ge.s32.totalorder %s31, 2
    %s33 = scalar_select %p32, 0, %s31
    %s34 = ssub.s32 %s21, %s33
    %s35 = ssub.s32 %s22, %s29
    %s36 = sor.u32 %s34, %s35
    %p37 = scmp.eq.s32.totalorder %s36, 0
    %s39 = sadd.s32 %s38, 1
    %s40 = scalar_select %p37, %s38, %s39
    %p43 = pneg %p37
    %p44 = scmp.eq.s32.totalorder %s14, 1
    %p45 = por %p43, %p44
    %p46 = scmp.ne.s32.totalorder %s38, %s41
    %p47 = scmp.eq.s32.totalorder %s14, 0
    %p48 = por %p46, %p47
    %p49 = scmp.ne.s32.totalorder %s38, %s41
    %p50 = scmp.eq.s32.totalorder %s19, 1
    %p51 = por %p49, %p50
    %p52 = scmp.ne.s32.totalorder %s41, %s42
    %p53 = scmp.eq.s32.totalorder %s19, 0
    %p54 = por %p52, %p53
    %p55 = scmp.ne.s32.totalorder %s41, %s42
    %p56 = scmp.eq.s32.totalorder %s20, 1
    %p57 = por %p55, %p56
    %p59 = scmp.ne.s32.totalorder %s42, %s58
    %p60 = scmp.eq.s32.totalorder %s20, 0
    %p61 = por %p59, %p60
    %s62 = ssub.s32 %s21, %s33
    %s63 = ssub.s32 %s22, %s29
    %s64 = sor.u32 %s62, %s63
    %p65 = scmp.eq.s32.totalorder %s64, 0
    %s67 = sadd.s32 %s66, 1
    %s68 = scalar_select %p65, %s66, %s67
    %p71 = pneg %p65
    %p72 = scmp.eq.s32.totalorder %s14, 1
    %p73 = por %p71, %p72
    %p74 = scmp.ne.s32.totalorder %s66, %s69
    %p75 = scmp.eq.s32.totalorder %s14, 0
    %p76 = por %p74, %p75
    %p77 = scmp.ne.s32.totalorder %s66, %s69
    %p78 = scmp.eq.s32.totalorder %s19, 1
    %p79 = por %p77, %p78
    %p80 = scmp.ne.s32.totalorder %s69, %s70
    %p81 = scmp.eq.s32.totalorder %s19, 0
    %p82 = por %p80, %p81
    %p83 = scmp.ne.s32.totalorder %s69, %s70
    %p84 = scmp.eq.s32.totalorder %s20, 1
    %p85 = por %p83, %p84
    %p87 = scmp.ne.s32.totalorder %s70, %s86
    %p88 = scmp.eq.s32.totalorder %s20, 0
    %p89 = por %p87, %p88
    %s90 = ssub.s32 %s21, %s33
    %s91 = ssub.s32 %s22, %s29
    %s92 = sor.u32 %s90, %s91
    %p93 = scmp.eq.s32.totalorder %s92, 0
    %s95 = sadd.s32 %s94, 1
    %s96 = scalar_select %p93, %s94, %s95
    %p99 = pneg %p93
    %p100 = scmp.eq.s32.totalorder %s14, 1
    %p101 = por %p99, %p100
    %p102 = scmp.ne.s32.totalorder %s94, %s97
    %p103 = scmp.eq.s32.totalorder %s14, 0
    %p104 = por %p102, %p103
    %p105 = scmp.ne.s32.totalorder %s94, %s97
    %p106 = scmp.eq.s32.totalorder %s19, 1
    %p107 = por %p105, %p106
    %p108 = scmp.ne.s32.totalorder %s97, %s98
    %p109 = scmp.eq.s32.totalorder %s19, 0
    %p110 = por %p108, %p109
    %p111 = scmp.ne.s32.totalorder %s97, %s98
    %p112 = scmp.eq.s32.totalorder %s20, 1
    %p113 = por %p111, %p112
    %p115 = scmp.ne.s32.totalorder %s98, %s114
    %p116 = scmp.eq.s32.totalorder %s20, 0
    %p117 = por %p115, %p116
    %s119 = sadd.s32 %s118, 1
    %p122 = scmp.eq.s32.totalorder %s14, 1
    %p123 = scmp.ne.s32.totalorder %s118, %s120
    %p124 = scmp.eq.s32.totalorder %s14, 0
    %p125 = por %p123, %p124
    %p126 = scmp.ne.s32.totalorder %s118, %s120
    %p127 = scmp.eq.s32.totalorder %s19, 1
    %p128 = por %p126, %p127
    %p129 = scmp.ne.s32.totalorder %s120, %s121
    %p130 = scmp.eq.s32.totalorder %s19, 0
    %p131 = por %p129, %p130
    %p132 = scmp.ne.s32.totalorder %s120, %s121
    %p133 = scmp.eq.s32.totalorder %s20, 1
    %p134 = por %p132, %p133
    %p136 = scmp.ne.s32.totalorder %s121, %s135
    %p137 = scmp.eq.s32.totalorder %s20, 0
    %p138 = por %p136, %p137
    %s140 = sadd.s32 %s139, 1
    %p143 = scmp.eq.s32.totalorder %s14, 1
    %p144 = scmp.ne.s32.totalorder %s139, %s141
    %p145 = scmp.eq.s32.totalorder %s14, 0
    %p146 = por %p144, %p145
    %p147 = scmp.ne.s32.totalorder %s139, %s141
    %p148 = scmp.eq.s32.totalorder %s19, 1
    %p149 = por %p147, %p148
    %p150 = scmp.ne.s32.totalorder %s141, %s142
    %p151 = scmp.eq.s32.totalorder %s19, 0
    %p152 = por %p150, %p151
    %p153 = scmp.ne.s32.totalorder %s141, %s142
    %p154 = scmp.eq.s32.totalorder %s20, 1
    %p155 = por %p153, %p154
    %p157 = scmp.ne.s32.totalorder %s142, %s156
    %p158 = scmp.eq.s32.totalorder %s20, 0
    %p159 = por %p157, %p158
    %s161 = sadd.s32 %s160, 1
    %p164 = scmp.eq.s32.totalorder %s14, 1
    %p165 = scmp.ne.s32.totalorder %s160, %s162
    %p166 = scmp.eq.s32.totalorder %s14, 0
    %p167 = por %p165, %p166
    %p168 = scmp.ne.s32.totalorder %s160, %s162
    %p169 = scmp.eq.s32.totalorder %s19, 1
    %p170 = por %p168, %p169
    %p171 = scmp.ne.s32.totalorder %s162, %s163
    %p172 = scmp.eq.s32.totalorder %s19, 0
    %p173 = por %p171, %p172
    %p174 = scmp.ne.s32.totalorder %s162, %s163
    %p175 = scmp.eq.s32.totalorder %s20, 1
    %p176 = por %p174, %p175
    %p178 = scmp.ne.s32.totalorder %s163, %s177
    %p179 = scmp.eq.s32.totalorder %s20, 0
    %p180 = por %p178, %p179
    %s182 = sadd.s32 %s181, 1
    %p185 = scmp.eq.s32.totalorder %s14, 1
    %p186 = scmp.ne.s32.totalorder %s181, %s183
    %p187 = scmp.eq.s32.totalorder %s14, 0
    %p188 = por %p186, %p187
    %p189 = scmp.ne.s32.totalorder %s181, %s183
    %p190 = scmp.eq.s32.totalorder %s19, 1
    %p191 = por %p189, %p190
    %p192 = scmp.ne.s32.totalorder %s183, %s184
    %p193 = scmp.eq.s32.totalorder %s19, 0
    %p194 = por %p192, %p193
    %p195 = scmp.ne.s32.totalorder %s183, %s184
    %p196 = scmp.eq.s32.totalorder %s20, 1
    %p197 = por %p195, %p196
    %p199 = scmp.ne.s32.totalorder %s184, %s198
    %p200 = scmp.eq.s32.totalorder %s20, 0
    %p201 = por %p199, %p200
    %s203 = sadd.s32 %s202, 1
    %p206 = scmp.eq.s32.totalorder %s14, 1
    %p207 = scmp.ne.s32.totalorder %s202, %s204
    %p208 = scmp.eq.s32.totalorder %s14, 0
    %p209 = por %p207, %p208
    %p210 = scmp.ne.s32.totalorder %s202, %s204
    %p211 = scmp.eq.s32.totalorder %s19, 1
    %p212 = por %p210, %p211
    %p213 = scmp.ne.s32.totalorder %s204, %s205
    %p214 = scmp.eq.s32.totalorder %s19, 0
    %p215 = por %p213, %p214
    %p216 = scmp.ne.s32.totalorder %s204, %s205
    %p217 = scmp.eq.s32.totalorder %s20, 1
    %p218 = por %p216, %p217
    %p220 = scmp.ne.s32.totalorder %s205, %s219
    %p221 = scmp.eq.s32.totalorder %s20, 0
    %p222 = por %p220, %p221
    %s223 = ssub.s32 %s21, %s33
    %s224 = ssub.s32 %s22, %s29
    %s225 = sor.u32 %s223, %s224
    %p226 = scmp.eq.s32.totalorder %s225, 0
    %s228 = sadd.s32 %s227, 1
    %s229 = scalar_select %p226, %s227, %s228
    %p232 = pneg %p226
    %p233 = scmp.eq.s32.totalorder %s14, 1
    %p234 = por %p232, %p233
    %p235 = scmp.ne.s32.totalorder %s227, %s230
    %p236 = scmp.eq.s32.totalorder %s14, 0
    %p237 = por %p235, %p236
    %p238 = scmp.ne.s32.totalorder %s227, %s230
    %p239 = scmp.eq.s32.totalorder %s19, 1
    %p240 = por %p238, %p239
    %p241 = scmp.ne.s32.totalorder %s230, %s231
    %p242 = scmp.eq.s32.totalorder %s19, 0
    %p243 = por %p241, %p242
    %p244 = scmp.ne.s32.totalorder %s230, %s231
    %p245 = scmp.eq.s32.totalorder %s20, 1
    %p246 = por %p244, %p245
    %p248 = scmp.ne.s32.totalorder %s231, %s247
    %p249 = scmp.eq.s32.totalorder %s20, 0
    %p250 = por %p248, %p249
    %p251 = scmp.le.s32.totalorder 1, %s14
    %p252 = scmp.lt.s32.totalorder %s14, 3
    %p253 = pnand %p251, %p252
    %p254 = pneg %p253
    // Predicated region
    $region9: #{bidinet_forward.1} parent=5 // pred_check
      _
    $region10: #{bidinet_forward.1} parent=5 // pred_check_branch
      %256 = sbr.rel (%p253) target = $region12
    $region11: #{bidinet_forward.1} parent=5 // pred_region
      %s257 = ssub.s32 %s14, 1
      // Predicated region
      $region13: #{bidinet_forward.1} parent=11 // pred_check
        %p258 = pneg %p131
      $region14: #{bidinet_forward.1} parent=11 // pred_check_branch
        %260 = sbr.rel (%p258) target = $region16
      $region15: #{bidinet_forward.1} parent=11 // pred_region
        _
      $region16: #{bidinet_forward.1} parent=11 // pred_fallthru
        _
      // Predicated region
      $region17: #{bidinet_forward.1} parent=11 // pred_check
        %p261 = pneg %p152
      $region18: #{bidinet_forward.1} parent=11 // pred_check_branch
        %263 = sbr.rel (%p261) target = $region20
      $region19: #{bidinet_forward.1} parent=11 // pred_region
        _
      $region20: #{bidinet_forward.1} parent=11 // pred_fallthru
        _
      // Predicated region
      $region21: #{bidinet_forward.1} parent=11 // pred_check
        %p264 = pneg %p173
      $region22: #{bidinet_forward.1} parent=11 // pred_check_branch
        %266 = sbr.rel (%p264) target = $region24
      $region23: #{bidinet_forward.1} parent=11 // pred_region
        _
      $region24: #{bidinet_forward.1} parent=11 // pred_fallthru
        _
      // Predicated region
      $region25: #{bidinet_forward.1} parent=11 // pred_check
        %p267 = pneg %p194
      $region26: #{bidinet_forward.1} parent=11 // pred_check_branch
        %269 = sbr.rel (%p267) target = $region28
      $region27: #{bidinet_forward.1} parent=11 // pred_region
        _
      $region28: #{bidinet_forward.1} parent=11 // pred_fallthru
        _
      // Predicated region
      $region29: #{bidinet_forward.1} parent=11 // pred_check
        %p270 = pneg %p215
      $region30: #{bidinet_forward.1} parent=11 // pred_check_branch
        %272 = sbr.rel (%p270) target = $region32
      $region31: #{bidinet_forward.1} parent=11 // pred_region
        _
      $region32: #{bidinet_forward.1} parent=11 // pred_fallthru
        _
    $region12: #{bidinet_forward.1} parent=5 // pred_fallthru
      _
    %p273 = scmp.lt.s32.totalorder %s14, 2
    // Predicated region
    $region33: #{bidinet_forward.1} parent=5 // pred_check
      %p274 = pneg %p273
    $region34: #{bidinet_forward.1} parent=5 // pred_check_branch
      %276 = sbr.rel (%p274) target = $region36
    $region35: #{bidinet_forward.1} parent=5 // pred_region
      // Predicated region
      $region37: #{bidinet_forward.1} parent=35 // pred_check
        %p277 = pneg %p48
      $region38: #{bidinet_forward.1} parent=35 // pred_check_branch
        %279 = sbr.rel (%p277) target = $region40
      $region39: #{bidinet_forward.1} parent=35 // pred_region
        %s280 = smul.u32 2, %s22
        %p281 = scmp.lt.s32.totalorder %s21, 1
        %s282 = scalar_select %p281, %s21, 1
        %p283 = scmp.lt.s32.totalorder %s280, 1
        %s284 = scalar_select %p283, %s280, 1
        %s285 = smul.addr %s282, 8
        %s286 = sadd.s32 %s284, %s285
        %s287 = smul.addr %s286, 4
        %s288 = scalar_lea.vmem %s0, %s287
        %s289 = smul.u32 2, %s22
      $region40: #{bidinet_forward.1} parent=35 // pred_fallthru
        _
      // Predicated region
      $region41: #{bidinet_forward.1} parent=35 // pred_check
        %p290 = pneg %p76
      $region42: #{bidinet_forward.1} parent=35 // pred_check_branch
        %292 = sbr.rel (%p290) target = $region44
      $region43: #{bidinet_forward.1} parent=35 // pred_region
        %s293 = smul.u32 2, %s22
        %p294 = scmp.lt.s32.totalorder %s21, 1
        %s295 = scalar_select %p294, %s21, 1
        %p296 = scmp.lt.s32.totalorder %s293, 1
        %s297 = scalar_select %p296, %s293, 1
        %s298 = smul.addr %s295, 2
        %s299 = sadd.s32 %s297, %s298
        %s300 = smul.addr %s299, 2
        %s301 = scalar_lea.vmem %s1, %s300
        %s302 = smul.u32 2, %s22
      $region44: #{bidinet_forward.1} parent=35 // pred_fallthru
        _
      // Predicated region
      $region45: #{bidinet_forward.1} parent=35 // pred_check
        %p303 = pneg %p104
      $region46: #{bidinet_forward.1} parent=35 // pred_check_branch
        %305 = sbr.rel (%p303) target = $region48
      $region47: #{bidinet_forward.1} parent=35 // pred_region
        %s306 = smul.u32 2, %s22
        %p307 = scmp.lt.s32.totalorder %s21, 1
        %s308 = scalar_select %p307, %s21, 1
        %p309 = scmp.lt.s32.totalorder %s306, 1
        %s310 = scalar_select %p309, %s306, 1
        %s311 = smul.addr %s310, 4
        %s312 = smul.addr %s308, 8
        %s313 = sadd.s32 %s311, %s312
        %s314 = smul.addr %s313, 4
        %s315 = scalar_lea.vmem %s2, %s314
        %s316 = smul.u32 2, %s22
      $region48: #{bidinet_forward.1} parent=35 // pred_fallthru
        _
    $region36: #{bidinet_forward.1} parent=5 // pred_fallthru
      _
    %p317 = scmp.le.s32.totalorder 1, %s14
    %p318 = scmp.lt.s32.totalorder %s14, 3
    %p319 = pnand %p317, %p318
    %p320 = pneg %p319
    // Predicated region
    $region49: #{bidinet_forward.1} parent=5 // pred_check
      _
    $region50: #{bidinet_forward.1} parent=5 // pred_check_branch
      %322 = sbr.rel (%p319) target = $region52
    $region51: #{bidinet_forward.1} parent=5 // pred_region
      %s323 = ssub.s32 %s14, 1
      %s324 = smul.u32 2, %s24
      %p325 = scmp.lt.s32.totalorder %s23, 1
      %s326 = scalar_select %p325, %s23, 1
      %p327 = scmp.lt.s32.totalorder %s324, 1
      %s328 = scalar_select %p327, %s324, 1
      %s329 = smul.addr %s326, 8
      %s330 = sadd.s32 %s328, %s329
      %s331 = smul.addr %s330, 4
      %s332 = scalar_lea.vmem %s0, %s331
      %p333 = pneg %p54
      %p334 = pneg %p51
      %s335 = smul.u32 2, %s24
      %p336 = scmp.lt.s32.totalorder %s23, 1
      %s337 = scalar_select %p336, %s23, 1
      %p338 = scmp.lt.s32.totalorder %s335, 1
      %s339 = scalar_select %p338, %s335, 1
      %s340 = smul.addr %s337, 2
      %s341 = sadd.s32 %s339, %s340
      %s342 = smul.addr %s341, 2
      %s343 = scalar_lea.vmem %s1, %s342
      %p344 = pneg %p82
      %p345 = pneg %p79
      %s346 = smul.u32 2, %s24
      %p347 = scmp.lt.s32.totalorder %s23, 1
      %s348 = scalar_select %p347, %s23, 1
      %p349 = scmp.lt.s32.totalorder %s346, 1
      %s350 = scalar_select %p349, %s346, 1
      %s351 = smul.addr %s350, 4
      %s352 = smul.addr %s348, 8
      %s353 = sadd.s32 %s351, %s352
      %s354 = smul.addr %s353, 4
      %s355 = scalar_lea.vmem %s2, %s354
      %p356 = pneg %p110
      %p357 = pneg %p107
      %p358 = pneg %p131
      %p359 = pneg %p128
      %p360 = pneg %p152
      %p361 = pneg %p149
      %p362 = pneg %p173
      %p363 = pneg %p170
      %p364 = pneg %p194
      %p365 = pneg %p191
      %p366 = pneg %p215
      %p367 = pneg %p212
      %p368 = pneg %p243
      %p369 = pneg %p240
      %s370 = smul.u32 2, %s24
      %p371 = scmp.lt.s32.totalorder %s23, 1
      %s372 = scalar_select %p371, %s23, 1
      %p373 = scmp.lt.s32.totalorder %s370, 1
      %s374 = scalar_select %p373, %s370, 1
      %s375 = smul.addr %s372, 8
      %s376 = sadd.s32 %s374, %s375
      %s377 = smul.addr %s376, 4
      %s378 = scalar_lea.vmem %s8, %s377
      %s379 = smul.u32 2, %s24
      %p380 = scmp.lt.s32.totalorder %s23, 1
      %s381 = scalar_select %p380, %s23, 1
      %p382 = scmp.lt.s32.totalorder %s379, 1
      %s383 = scalar_select %p382, %s379, 1
      %s384 = smul.addr %s381, 8
      %s385 = sadd.s32 %s383, %s384
      %s386 = smul.addr %s385, 4
      %s387 = scalar_lea.vmem %s0, %s386
      %s388 = smul.u32 2, %s24
      %s389 = smul.u32 2, %s24
      %p390 = scmp.lt.s32.totalorder %s23, 1
      %s391 = scalar_select %p390, %s23, 1
      %p392 = scmp.lt.s32.totalorder %s389, 1
      %s393 = scalar_select %p392, %s389, 1
      %s394 = smul.addr %s391, 2
      %s395 = sadd.s32 %s393, %s394
      %s396 = smul.addr %s395, 2
      %s397 = scalar_lea.vmem %s1, %s396
      %s398 = smul.u32 2, %s24
      %s399 = smul.u32 2, %s24
      %p400 = scmp.lt.s32.totalorder %s23, 1
      %s401 = scalar_select %p400, %s23, 1
      %p402 = scmp.lt.s32.totalorder %s399, 1
      %s403 = scalar_select %p402, %s399, 1
      %s404 = smul.addr %s403, 4
      %s405 = smul.addr %s401, 8
      %s406 = sadd.s32 %s404, %s405
      %s407 = smul.addr %s406, 4
      %s408 = scalar_lea.vmem %s2, %s407
      %s409 = smul.u32 2, %s24
      %s410 = smul.u32 2, %s24
      %p411 = scmp.lt.s32.totalorder %s23, 1
      %s412 = scalar_select %p411, %s23, 1
      %p413 = scmp.lt.s32.totalorder %s410, 1
      %s414 = scalar_select %p413, %s410, 1
      %s415 = smul.addr %s412, 8
      %s416 = sadd.s32 %s414, %s415
      %s417 = smul.addr %s416, 4
      %s418 = scalar_lea.vmem %s8, %s417
      %s419 = smul.u32 2, %s24
      %v425 = vld [vmem:[%s4] sm:$0xf]
      %v426 = vld [vmem:[%s4 + $0x4] sm:$0xf]
      %v427 = vld [vmem:[%s4 + $0x8] sm:$0xf]
      %v428 = vld [vmem:[%s4 + $0xc] sm:$0xf]
      %v429 = vld [vmem:[%s4 + $0x10] sm:$0xf]
      %v430 = vld [vmem:[%s4 + $0x14] sm:$0xf]
      %v431 = vld [vmem:[%s387] sm:$0xff]
      %v432 = vld [vmem:[%s387 + $0x8] sm:$0xff]
      %v433 = vld [vmem:[%s387 + $0x10] sm:$0xff]
      %v434 = vld [vmem:[%s387 + $0x18] sm:$0xff]
      %v435 = vld [vmem:[%s5] sm:$0xf]
      %v436 = vld [vmem:[%s5 + $0x4] sm:$0xf]
      %v437 = vld [vmem:[%s5 + $0x8] sm:$0xf]
      %v438 = vld [vmem:[%s5 + $0xc] sm:$0xf]
      %v439 = vld [vmem:[%s5 + $0x10] sm:$0xf]
      %v440 = vld [vmem:[%s5 + $0x14] sm:$0xf]
      %v441 = vld [vmem:[%s397] sm:$0xf]
      %v448 = vunpack.c.l.b16 %v435
      %v449 = vunpack.c.l.b16 %v436
      %v450 = vunpack.c.l.b16 %v437
      %v451 = vunpack.c.l.b16 %v438
      %v452 = vunpack.c.l.b16 %v439
      %v453 = vunpack.c.l.b16 %v440
      %v454 = vpack.c.b16 %v449, %v448
      %v455 = vpack.c.b16 %v451, %v450
      %v456 = vpack.c.b16 %v453, %v452
      %v459 = vunpack.c.l.s4 1983009808
      %v460 = vunpack.c.0.s8 %v459
      %v461 = vlaneseq
      %v462 = vshrl.u32 %v461, 7
      %v463 = vsub.s32 %v460, %v462
      %v464 = vrot.slane %v441, %v463
      %v465 = vcombine.high %v464, %v464
      %vm466 = vcmask 23552
      %v468 = vsel %vm466, %v454, 0
      %v471 = vsel %vm466, %v455, 0
      %v474 = vsel %vm466, %v456, 0
      %vm476 = vcmask 1040384
      %vm477 = vcmask 1041408
      %v478 = vsel %vm476, 4294967295, 65535
      %v479 = vsel %vm477, %v478, 0
      %v481 = vand.u32 %v464, %v479
      %v484 = vand.u32 %v465, %v479
      %486 = vmatprep.subr.bf16.mxu0 %v484
      %487 = vmatpush1.bf16.msra.mxu0 %v481
      %488 = vmatprep.subr.bf16.mxu0 0
      %489 = vmatpush1.bf16.msra.mxu0 0
      %490 = vmatprep.subr.bf16.mxu0 0
      %491 = vmatpush1.bf16.msra.mxu0 0
      %492 = vmatprep.subr.bf16.mxu0 0
      %493 = vmatpush1.bf16.msra.mxu0 0
      %494 = vmatprep.subr.bf16.mxu0 0
      %495 = vmatpush1.bf16.msra.mxu0 0
      %496 = vmatprep.subr.bf16.mxu0 0
      %497 = vmatpush1.bf16.msra.mxu0 0
      %498 = vmatprep.subr.bf16.mxu0 0
      %499 = vmatpush1.bf16.msra.mxu0 0
      %500 = vmatprep.subr.bf16.mxu0 0
      %501 = vmatpush1.bf16.msra.mxu0 0
      %502 = vmatprep.subr.bf16.mxu0 0
      %503 = vmatpush1.bf16.msra.mxu0 0
      %504 = vmatprep.subr.bf16.mxu0 0
      %505 = vmatpush1.bf16.msra.mxu0 0
      %506 = vmatprep.subr.bf16.mxu0 0
      %507 = vmatpush1.bf16.msra.mxu0 0
      %508 = vmatprep.subr.bf16.mxu0 0
      %509 = vmatpush1.bf16.msra.mxu0 0
      %510 = vmatprep.subr.bf16.mxu0 0
      %511 = vmatpush1.bf16.msra.mxu0 0
      %512 = vmatprep.subr.bf16.mxu0 0
      %513 = vmatpush1.bf16.msra.mxu0 0
      %514 = vmatprep.subr.bf16.mxu0 0
      %515 = vmatpush1.bf16.msra.mxu0 0
      %516 = vmatprep.subr.bf16.mxu0 0
      %517 = vmatpush1.bf16.msra.mxu0 0
      %518 = vmatprep.mubr.bf16.mxu0 0
      %519 = vmatmul.mubr.bf16.gmra.mrb[0].mxu0 %v468
      %v520 = vpop.f32.mrb[0].mxu0
      %v521 = vadd.f32 0.0, %v520
      %v522 = vpop.f32.mrb[0].mxu0
      %v523 = vadd.f32 0.0, %v522
      %v524 = vpop.f32.mrb[0].mxu0
      %v525 = vadd.f32 0.0, %v524
      %v526 = vpop.f32.mrb[0].mxu0
      %v527 = vadd.f32 0.0, %v526
      %528 = vmatprep.mubr.bf16.mxu0 0
      %529 = vmatmul.mubr.bf16.gmra.mrb[0].mxu0 %v471
      %v530 = vpop.f32.mrb[0].mxu0
      %v531 = vadd.f32 0.0, %v530
      %v532 = vpop.f32.mrb[0].mxu0
      %v533 = vadd.f32 0.0, %v532
      %v534 = vpop.f32.mrb[0].mxu0
      %v535 = vadd.f32 0.0, %v534
      %v536 = vpop.f32.mrb[0].mxu0
      %v537 = vadd.f32 0.0, %v536
      %538 = vmatprep.mubr.bf16.mxu0 0
      %539 = vmatmul.mubr.bf16.gmra.mrb[0].mxu0 %v474
      %v540 = vpop.f32.mrb[0].mxu0
      %v541 = vadd.f32 0.0, %v540
      %v542 = vpop.f32.mrb[0].mxu0
      %v543 = vadd.f32 0.0, %v542
      %v544 = vpop.f32.mrb[0].mxu0
      %v545 = vadd.f32 0.0, %v544
      %v546 = vpop.f32.mrb[0].mxu0
      %v547 = vadd.f32 0.0, %v546
      %548 = vdwg.mxu0
      %v555 = vunpack.c.l.b16 %v425
      %v556 = vunpack.c.l.b16 %v426
      %v557 = vunpack.c.l.b16 %v427
      %v558 = vunpack.c.l.b16 %v428
      %v559 = vunpack.c.l.b16 %v429
      %v560 = vunpack.c.l.b16 %v430
      %v561 = vpack.c.b16 %v556, %v555
      %v562 = vpack.c.b16 %v558, %v557
      %v563 = vpack.c.b16 %v560, %v559
      %v568 = vunpack.c.l.b16 %v431
      %v569 = vunpack.c.h.b16 %v431
      %v570 = vunpack.c.l.b16 %v432
      %v571 = vunpack.c.h.b16 %v432
      %v572 = vunpack.c.l.b16 %v433
      %v573 = vunpack.c.h.b16 %v433
      %v574 = vunpack.c.l.b16 %v434
      %v575 = vunpack.c.h.b16 %v434
      %v576 = vpack.c.b16 %v570, %v568
      %v577 = vpack.c.b16 %v571, %v569
      %v578 = vpack.c.b16 %v574, %v572
      %v579 = vpack.c.b16 %v575, %v573
      %vm582 = vcmask 252928
      %v584 = vsel %vm582, %v561, 0
      %v587 = vsel %vm582, %v562, 0
      %v590 = vsel %vm582, %v563, 0
      %vm592 = vcmask 1046528
      %vm593 = vcmask 1047552
      %v594 = vsel %vm592, 4294967295, 65535
      %v595 = vsel %vm593, %v594, 0
      %v597 = vand.u32 %v578, %v595
      %v600 = vand.u32 %v579, %v595
      %602 = vmatprep.subr.bf16.mxu0 %v577
      %603 = vmatpush1.bf16.msra.mxu0 %v576
      %604 = vmatprep.subr.bf16.mxu0 %v600
      %605 = vmatpush1.bf16.msra.mxu0 %v597
      %606 = vmatprep.subr.bf16.mxu0 0
      %607 = vmatpush1.bf16.msra.mxu0 0
      %608 = vmatprep.subr.bf16.mxu0 0
      %609 = vmatpush1.bf16.msra.mxu0 0
      %610 = vmatprep.subr.bf16.mxu0 0
      %611 = vmatpush1.bf16.msra.mxu0 0
      %612 = vmatprep.subr.bf16.mxu0 0
      %613 = vmatpush1.bf16.msra.mxu0 0
      %614 = vmatprep.subr.bf16.mxu0 0
      %615 = vmatpush1.bf16.msra.mxu0 0
      %616 = vmatprep.subr.bf16.mxu0 0
      %617 = vmatpush1.bf16.msra.mxu0 0
      %618 = vmatprep.subr.bf16.mxu0 0
      %619 = vmatpush1.bf16.msra.mxu0 0
      %620 = vmatprep.subr.bf16.mxu0 0
      %621 = vmatpush1.bf16.msra.mxu0 0
      %622 = vmatprep.subr.bf16.mxu0 0
      %623 = vmatpush1.bf16.msra.mxu0 0
      %624 = vmatprep.subr.bf16.mxu0 0
      %625 = vmatpush1.bf16.msra.mxu0 0
      %626 = vmatprep.subr.bf16.mxu0 0
      %627 = vmatpush1.bf16.msra.mxu0 0
      %628 = vmatprep.subr.bf16.mxu0 0
      %629 = vmatpush1.bf16.msra.mxu0 0
      %630 = vmatprep.subr.bf16.mxu0 0
      %631 = vmatpush1.bf16.msra.mxu0 0
      %632 = vmatprep.subr.bf16.mxu0 0
      %633 = vmatpush1.bf16.msra.mxu0 0
      %634 = vmatprep.mubr.bf16.mxu0 0
      %635 = vmatmul.mubr.bf16.gmra.mrb[0].mxu0 %v584
      %v636 = vpop.f32.mrb[0].mxu0
      %v637 = vadd.f32 %v521, %v636
      %v638 = vpop.f32.mrb[0].mxu0
      %v639 = vadd.f32 %v523, %v638
      %v640 = vpop.f32.mrb[0].mxu0
      %v641 = vadd.f32 %v525, %v640
      %v642 = vpop.f32.mrb[0].mxu0
      %v643 = vadd.f32 %v527, %v642
      %644 = vmatprep.mubr.bf16.mxu0 0
      %645 = vmatmul.mubr.bf16.gmra.mrb[0].mxu0 %v587
      %v646 = vpop.f32.mrb[0].mxu0
      %v647 = vadd.f32 %v531, %v646
      %v648 = vpop.f32.mrb[0].mxu0
      %v649 = vadd.f32 %v533, %v648
      %v650 = vpop.f32.mrb[0].mxu0
      %v651 = vadd.f32 %v535, %v650
      %v652 = vpop.f32.mrb[0].mxu0
      %v653 = vadd.f32 %v537, %v652
      %654 = vmatprep.mubr.bf16.mxu0 0
      %655 = vmatmul.mubr.bf16.gmra.mrb[0].mxu0 %v590
      %v656 = vpop.f32.mrb[0].mxu0
      %v657 = vadd.f32 %v541, %v656
      %v658 = vpop.f32.mrb[0].mxu0
      %v659 = vadd.f32 %v543, %v658
      %v660 = vpop.f32.mrb[0].mxu0
      %v661 = vadd.f32 %v545, %v660
      %v662 = vpop.f32.mrb[0].mxu0
      %v663 = vadd.f32 %v547, %v662
      %664 = vdwg.mxu0
      %v665 = vld [vmem:[%s6] sm:$0xf]
      %v666 = vld [vmem:[%s6 + $0x4] sm:$0xf]
      %v667 = vld [vmem:[%s6 + $0x8] sm:$0xf]
      %v668 = vld [vmem:[%s6 + $0xc] sm:$0xf]
      %v669 = vld [vmem:[%s6 + $0x10] sm:$0xf]
      %v670 = vld [vmem:[%s6 + $0x14] sm:$0xf]
      %v671 = vld [vmem:[%s408] sm:$0xf]
      %v672 = vld [vmem:[%s408 + $0x4] sm:$0xf]
      %v673 = vld [vmem:[%s408 + $0x8] sm:$0xf]
      %v674 = vld [vmem:[%s408 + $0xc] sm:$0xf]
      %v681 = vunpack.c.l.b16 %v665
      %v682 = vunpack.c.l.b16 %v666
      %v683 = vunpack.c.l.b16 %v667
      %v684 = vunpack.c.l.b16 %v668
      %v685 = vunpack.c.l.b16 %v669
      %v686 = vunpack.c.l.b16 %v670
      %v687 = vpack.c.b16 %v682, %v681
      %v688 = vpack.c.b16 %v684, %v683
      %v689 = vpack.c.b16 %v686, %v685
      %v694 = vunpack.c.l.b16 %v671
      %v695 = vunpack.c.l.b16 %v672
      %v696 = vunpack.c.l.b16 %v673
      %v697 = vunpack.c.l.b16 %v674
      %v698 = vpack.c.b16 %v695, %v694
      %v699 = vpack.c.b16 %v697, %v696
      %v702 = vsel %vm582, %v687, 0
      %v705 = vsel %vm582, %v688, 0
      %v708 = vsel %vm582, %v689, 0
      %v711 = vand.u32 %v699, %v595
      %713 = vmatprep.subr.bf16.mxu0 0
      %714 = vmatpush1.bf16.msra.mxu0 %v698
      %715 = vmatprep.subr.bf16.mxu0 0
      %716 = vmatpush1.bf16.msra.mxu0 %v711
      %717 = vmatprep.subr.bf16.mxu0 0
      %718 = vmatpush1.bf16.msra.mxu0 0
      %719 = vmatprep.subr.bf16.mxu0 0
      %720 = vmatpush1.bf16.msra.mxu0 0
      %721 = vmatprep.subr.bf16.mxu0 0
      %722 = vmatpush1.bf16.msra.mxu0 0
      %723 = vmatprep.subr.bf16.mxu0 0
      %724 = vmatpush1.bf16.msra.mxu0 0
      %725 = vmatprep.subr.bf16.mxu0 0
      %726 = vmatpush1.bf16.msra.mxu0 0
      %727 = vmatprep.subr.bf16.mxu0 0
      %728 = vmatpush1.bf16.msra.mxu0 0
      %729 = vmatprep.subr.bf16.mxu0 0
      %730 = vmatpush1.bf16.msra.mxu0 0
      %731 = vmatprep.subr.bf16.mxu0 0
      %732 = vmatpush1.bf16.msra.mxu0 0
      %733 = vmatprep.subr.bf16.mxu0 0
      %734 = vmatpush1.bf16.msra.mxu0 0
      %735 = vmatprep.subr.bf16.mxu0 0
      %736 = vmatpush1.bf16.msra.mxu0 0
      %737 = vmatprep.subr.bf16.mxu0 0
      %738 = vmatpush1.bf16.msra.mxu0 0
      %739 = vmatprep.subr.bf16.mxu0 0
      %740 = vmatpush1.bf16.msra.mxu0 0
      %741 = vmatprep.subr.bf16.mxu0 0
      %742 = vmatpush1.bf16.msra.mxu0 0
      %743 = vmatprep.subr.bf16.mxu0 0
      %744 = vmatpush1.bf16.msra.mxu0 0
      %745 = vmatprep.mubr.bf16.mxu0 0
      %746 = vmatmul.mubr.bf16.gmra.mrb[0].mxu0 %v702
      %v747 = vpop.f32.mrb[0].mxu0
      %v748 = vadd.f32 0.0, %v747
      %v749 = vpop.f32.mrb[0].mxu0
      %v750 = vpop.f32.mrb[0].mxu0
      %v751 = vadd.f32 0.0, %v750
      %v752 = vpop.f32.mrb[0].mxu0
      %753 = vmatprep.mubr.bf16.mxu0 0
      %754 = vmatmul.mubr.bf16.gmra.mrb[0].mxu0 %v705
      %v755 = vpop.f32.mrb[0].mxu0
      %v756 = vadd.f32 0.0, %v755
      %v757 = vpop.f32.mrb[0].mxu0
      %v758 = vpop.f32.mrb[0].mxu0
      %v759 = vadd.f32 0.0, %v758
      %v760 = vpop.f32.mrb[0].mxu0
      %761 = vmatprep.mubr.bf16.mxu0 0
      %762 = vmatmul.mubr.bf16.gmra.mrb[0].mxu0 %v708
      %v763 = vpop.f32.mrb[0].mxu0
      %v764 = vadd.f32 0.0, %v763
      %v765 = vpop.f32.mrb[0].mxu0
      %v766 = vpop.f32.mrb[0].mxu0
      %v767 = vadd.f32 0.0, %v766
      %v768 = vpop.f32.mrb[0].mxu0
      %769 = vdwg.mxu0
      %v770 = vpack.c.bf16 %v751, %v748
      %v771 = vpack.c.bf16 %v759, %v756
      %v772 = vpack.c.bf16 %v767, %v764
      %v773 = vld [vmem:[%s3] sm:$0x1]
      %vm774 = vcmask 15360
      %v776 = vsel %vm774, %v770, 0
      %v779 = vsel %vm774, %v771, 0
      %v782 = vsel %vm774, %v772, 0
      %v785 = vsel %vm476, %v773, 0
      %787 = vmatprep.subr.bf16.mxu0 0
      %788 = vmatpush1.bf16.msra.mxu0 %v785
      %789 = vmatprep.subr.bf16.mxu0 0
      %790 = vmatpush1.bf16.msra.mxu0 0
      %791 = vmatprep.subr.bf16.mxu0 0
      %792 = vmatpush1.bf16.msra.mxu0 0
      %793 = vmatprep.subr.bf16.mxu0 0
      %794 = vmatpush1.bf16.msra.mxu0 0
      %795 = vmatprep.subr.bf16.mxu0 0
      %796 = vmatpush1.bf16.msra.mxu0 0
      %797 = vmatprep.subr.bf16.mxu0 0
      %798 = vmatpush1.bf16.msra.mxu0 0
      %799 = vmatprep.subr.bf16.mxu0 0
      %800 = vmatpush1.bf16.msra.mxu0 0
      %801 = vmatprep.subr.bf16.mxu0 0
      %802 = vmatpush1.bf16.msra.mxu0 0
      %803 = vmatprep.subr.bf16.mxu0 0
      %804 = vmatpush1.bf16.msra.mxu0 0
      %805 = vmatprep.subr.bf16.mxu0 0
      %806 = vmatpush1.bf16.msra.mxu0 0
      %807 = vmatprep.subr.bf16.mxu0 0
      %808 = vmatpush1.bf16.msra.mxu0 0
      %809 = vmatprep.subr.bf16.mxu0 0
      %810 = vmatpush1.bf16.msra.mxu0 0
      %811 = vmatprep.subr.bf16.mxu0 0
      %812 = vmatpush1.bf16.msra.mxu0 0
      %813 = vmatprep.subr.bf16.mxu0 0
      %814 = vmatpush1.bf16.msra.mxu0 0
      %815 = vmatprep.subr.bf16.mxu0 0
      %816 = vmatpush1.bf16.msra.mxu0 0
      %817 = vmatprep.subr.bf16.mxu0 0
      %818 = vmatpush1.bf16.msra.mxu0 0
      %819 = vmatprep.mubr.bf16.mxu0 0
      %820 = vmatmul.mubr.bf16.gmra.mrb[0].mxu0 %v776
      %v821 = vpop.f32.mrb[0].mxu0
      %v822 = vadd.f32 0.0, %v821
      %v823 = vpop.f32.mrb[0].mxu0
      %v824 = vpop.f32.mrb[0].mxu0
      %v825 = vadd.f32 0.0, %v824
      %v826 = vpop.f32.mrb[0].mxu0
      %827 = vmatprep.mubr.bf16.mxu0 0
      %828 = vmatmul.mubr.bf16.gmra.mrb[0].mxu0 %v779
      %v829 = vpop.f32.mrb[0].mxu0
      %v830 = vadd.f32 0.0, %v829
      %v831 = vpop.f32.mrb[0].mxu0
      %v832 = vpop.f32.mrb[0].mxu0
      %v833 = vadd.f32 0.0, %v832
      %v834 = vpop.f32.mrb[0].mxu0
      %835 = vmatprep.mubr.bf16.mxu0 0
      %836 = vmatmul.mubr.bf16.gmra.mrb[0].mxu0 %v782
      %v837 = vpop.f32.mrb[0].mxu0
      %v838 = vadd.f32 0.0, %v837
      %v839 = vpop.f32.mrb[0].mxu0
      %v840 = vpop.f32.mrb[0].mxu0
      %v841 = vadd.f32 0.0, %v840
      %v842 = vpop.f32.mrb[0].mxu0
      %843 = vdwg.mxu0
      %850 = vrot.lane.b32.xlu0 %v822, 16
      %v851 = vpop.permute.xlu0 %850
      %852 = vrot.lane.b32.xlu0 %v825, 16
      %v853 = vpop.permute.xlu0 %852
      %854 = vrot.lane.b32.xlu0 %v830, 16
      %v855 = vpop.permute.xlu0 %854
      %856 = vrot.lane.b32.xlu0 %v833, 16
      %v857 = vpop.permute.xlu0 %856
      %858 = vrot.lane.b32.xlu0 %v838, 16
      %v859 = vpop.permute.xlu0 %858
      %860 = vrot.lane.b32.xlu0 %v841, 16
      %v861 = vpop.permute.xlu0 %860
      %868 = vrot.lane.b32.xlu0 %v822, 32
      %v869 = vpop.permute.xlu0 %868
      %870 = vrot.lane.b32.xlu0 %v825, 32
      %v871 = vpop.permute.xlu0 %870
      %872 = vrot.lane.b32.xlu0 %v830, 32
      %v873 = vpop.permute.xlu0 %872
      %874 = vrot.lane.b32.xlu0 %v833, 32
      %v875 = vpop.permute.xlu0 %874
      %876 = vrot.lane.b32.xlu0 %v838, 32
      %v877 = vpop.permute.xlu0 %876
      %878 = vrot.lane.b32.xlu0 %v841, 32
      %v879 = vpop.permute.xlu0 %878
      %886 = vrot.lane.b32.xlu0 %v822, 48
      %v887 = vpop.permute.xlu0 %886
      %888 = vrot.lane.b32.xlu0 %v825, 48
      %v889 = vpop.permute.xlu0 %888
      %890 = vrot.lane.b32.xlu0 %v830, 48
      %v891 = vpop.permute.xlu0 %890
      %892 = vrot.lane.b32.xlu0 %v833, 48
      %v893 = vpop.permute.xlu0 %892
      %894 = vrot.lane.b32.xlu0 %v838, 48
      %v895 = vpop.permute.xlu0 %894
      %896 = vrot.lane.b32.xlu0 %v841, 48
      %v897 = vpop.permute.xlu0 %896
      %904 = vrot.lane.b32.xlu0 %v822, 64
      %v905 = vpop.permute.xlu0 %904
      %906 = vrot.lane.b32.xlu0 %v825, 64
      %v907 = vpop.permute.xlu0 %906
      %908 = vrot.lane.b32.xlu0 %v830, 64
      %v909 = vpop.permute.xlu0 %908
      %910 = vrot.lane.b32.xlu0 %v833, 64
      %v911 = vpop.permute.xlu0 %910
      %912 = vrot.lane.b32.xlu0 %v838, 64
      %v913 = vpop.permute.xlu0 %912
      %914 = vrot.lane.b32.xlu0 %v841, 64
      %v915 = vpop.permute.xlu0 %914
      %922 = vrot.lane.b32.xlu0 %v822, 80
      %v923 = vpop.permute.xlu0 %922
      %924 = vrot.lane.b32.xlu0 %v825, 80
      %v925 = vpop.permute.xlu0 %924
      %926 = vrot.lane.b32.xlu0 %v830, 80
      %v927 = vpop.permute.xlu0 %926
      %928 = vrot.lane.b32.xlu0 %v833, 80
      %v929 = vpop.permute.xlu0 %928
      %930 = vrot.lane.b32.xlu0 %v838, 80
      %v931 = vpop.permute.xlu0 %930
      %932 = vrot.lane.b32.xlu0 %v841, 80
      %v933 = vpop.permute.xlu0 %932
      %940 = vrot.lane.b32.xlu0 %v822, 96
      %v941 = vpop.permute.xlu0 %940
      %942 = vrot.lane.b32.xlu0 %v825, 96
      %v943 = vpop.permute.xlu0 %942
      %944 = vrot.lane.b32.xlu0 %v830, 96
      %v945 = vpop.permute.xlu0 %944
      %946 = vrot.lane.b32.xlu0 %v833, 96
      %v947 = vpop.permute.xlu0 %946
      %948 = vrot.lane.b32.xlu0 %v838, 96
      %v949 = vpop.permute.xlu0 %948
      %950 = vrot.lane.b32.xlu0 %v841, 96
      %v951 = vpop.permute.xlu0 %950
      %958 = vrot.lane.b32.xlu0 %v822, 112
      %v959 = vpop.permute.xlu0 %958
      %960 = vrot.lane.b32.xlu0 %v825, 112
      %v961 = vpop.permute.xlu0 %960
      %962 = vrot.lane.b32.xlu0 %v830, 112
      %v963 = vpop.permute.xlu0 %962
      %964 = vrot.lane.b32.xlu0 %v833, 112
      %v965 = vpop.permute.xlu0 %964
      %966 = vrot.lane.b32.xlu0 %v838, 112
      %v967 = vpop.permute.xlu0 %966
      %968 = vrot.lane.b32.xlu0 %v841, 112
      %v969 = vpop.permute.xlu0 %968
      %vm976 = vcmask 130048
      %v977 = vsel %vm976, %v822, %v851
      %v978 = vsel %vm976, %v825, %v853
      %v979 = vsel %vm976, %v830, %v855
      %v980 = vsel %vm976, %v833, %v857
      %v981 = vsel %vm976, %v838, %v859
      %v982 = vsel %vm976, %v841, %v861
      %vm983 = vcmask 261120
      %v984 = vsel %vm983, %v977, %v869
      %v985 = vsel %vm983, %v978, %v871
      %v986 = vsel %vm983, %v979, %v873
      %v987 = vsel %vm983, %v980, %v875
      %v988 = vsel %vm983, %v981, %v877
      %v989 = vsel %vm983, %v982, %v879
      %vm990 = vcmask 392192
      %v991 = vsel %vm990, %v984, %v887
      %v992 = vsel %vm990, %v985, %v889
      %v993 = vsel %vm990, %v986, %v891
      %v994 = vsel %vm990, %v987, %v893
      %v995 = vsel %vm990, %v988, %v895
      %v996 = vsel %vm990, %v989, %v897
      %vm997 = vcmask 523264
      %v998 = vsel %vm997, %v991, %v905
      %v999 = vsel %vm997, %v992, %v907
      %v1000 = vsel %vm997, %v993, %v909
      %v1001 = vsel %vm997, %v994, %v911
      %v1002 = vsel %vm997, %v995, %v913
      %v1003 = vsel %vm997, %v996, %v915
      %vm1004 = vcmask 654336
      %v1005 = vsel %vm1004, %v998, %v923
      %v1006 = vsel %vm1004, %v999, %v925
      %v1007 = vsel %vm1004, %v1000, %v927
      %v1008 = vsel %vm1004, %v1001, %v929
      %v1009 = vsel %vm1004, %v1002, %v931
      %v1010 = vsel %vm1004, %v1003, %v933
      %vm1011 = vcmask 785408
      %v1012 = vsel %vm1011, %v1005, %v941
      %v1013 = vsel %vm1011, %v1006, %v943
      %v1014 = vsel %vm1011, %v1007, %v945
      %v1015 = vsel %vm1011, %v1008, %v947
      %v1016 = vsel %vm1011, %v1009, %v949
      %v1017 = vsel %vm1011, %v1010, %v951
      %vm1018 = vcmask 916480
      %v1019 = vsel %vm1018, %v1012, %v959
      %v1020 = vsel %vm1018, %v1013, %v961
      %v1021 = vsel %vm1018, %v1014, %v963
      %v1022 = vsel %vm1018, %v1015, %v965
      %v1023 = vsel %vm1018, %v1016, %v967
      %v1024 = vsel %vm1018, %v1017, %v969
      %s1025 = scalar_lea.vmem %s408, 16
      %v1026 = vld [vmem:[%s1025] sm:$0xf]
      %v1027 = vld [vmem:[%s1025 + $0x4] sm:$0xf]
      %v1028 = vld [vmem:[%s1025 + $0x8] sm:$0xf]
      %v1029 = vld [vmem:[%s1025 + $0xc] sm:$0xf]
      %v1034 = vunpack.c.l.b16 %v1026
      %v1035 = vunpack.c.l.b16 %v1027
      %v1036 = vunpack.c.l.b16 %v1028
      %v1037 = vunpack.c.l.b16 %v1029
      %v1038 = vpack.c.b16 %v1035, %v1034
      %v1039 = vpack.c.b16 %v1037, %v1036
      %v1042 = vand.u32 %v1039, %v595
      %1044 = vmatprep.subr.bf16.mxu0 0
      %1045 = vmatpush1.bf16.msra.mxu0 %v1038
      %1046 = vmatprep.subr.bf16.mxu0 0
      %1047 = vmatpush1.bf16.msra.mxu0 %v1042
      %1048 = vmatprep.subr.bf16.mxu0 0
      %1049 = vmatpush1.bf16.msra.mxu0 0
      %1050 = vmatprep.subr.bf16.mxu0 0
      %1051 = vmatpush1.bf16.msra.mxu0 0
      %1052 = vmatprep.subr.bf16.mxu0 0
      %1053 = vmatpush1.bf16.msra.mxu0 0
      %1054 = vmatprep.subr.bf16.mxu0 0
      %1055 = vmatpush1.bf16.msra.mxu0 0
      %1056 = vmatprep.subr.bf16.mxu0 0
      %1057 = vmatpush1.bf16.msra.mxu0 0
      %1058 = vmatprep.subr.bf16.mxu0 0
      %1059 = vmatpush1.bf16.msra.mxu0 0
      %1060 = vmatprep.subr.bf16.mxu0 0
      %1061 = vmatpush1.bf16.msra.mxu0 0
      %1062 = vmatprep.subr.bf16.mxu0 0
      %1063 = vmatpush1.bf16.msra.mxu0 0
      %1064 = vmatprep.subr.bf16.mxu0 0
      %1065 = vmatpush1.bf16.msra.mxu0 0
      %1066 = vmatprep.subr.bf16.mxu0 0
      %1067 = vmatpush1.bf16.msra.mxu0 0
      %1068 = vmatprep.subr.bf16.mxu0 0
      %1069 = vmatpush1.bf16.msra.mxu0 0
      %1070 = vmatprep.subr.bf16.mxu0 0
      %1071 = vmatpush1.bf16.msra.mxu0 0
      %1072 = vmatprep.subr.bf16.mxu0 0
      %1073 = vmatpush1.bf16.msra.mxu0 0
      %1074 = vmatprep.subr.bf16.mxu0 0
      %1075 = vmatpush1.bf16.msra.mxu0 0
      %1076 = vmatprep.mubr.bf16.mxu0 0
      %1077 = vmatmul.mubr.bf16.gmra.mrb[0].mxu0 %v702
      %v1078 = vpop.f32.mrb[0].mxu0
      %v1079 = vadd.f32 0.0, %v1078
      %v1080 = vpop.f32.mrb[0].mxu0
      %v1081 = vpop.f32.mrb[0].mxu0
      %v1082 = vadd.f32 0.0, %v1081
      %v1083 = vpop.f32.mrb[0].mxu0
      %1084 = vmatprep.mubr.bf16.mxu0 0
      %1085 = vmatmul.mubr.bf16.gmra.mrb[0].mxu0 %v705
      %v1086 = vpop.f32.mrb[0].mxu0
      %v1087 = vadd.f32 0.0, %v1086
      %v1088 = vpop.f32.mrb[0].mxu0
      %v1089 = vpop.f32.mrb[0].mxu0
      %v1090 = vadd.f32 0.0, %v1089
      %v1091 = vpop.f32.mrb[0].mxu0
      %1092 = vmatprep.mubr.bf16.mxu0 0
      %1093 = vmatmul.mubr.bf16.gmra.mrb[0].mxu0 %v708
      %v1094 = vpop.f32.mrb[0].mxu0
      %v1095 = vadd.f32 0.0, %v1094
      %v1096 = vpop.f32.mrb[0].mxu0
      %v1097 = vpop.f32.mrb[0].mxu0
      %v1098 = vadd.f32 0.0, %v1097
      %v1099 = vpop.f32.mrb[0].mxu0
      %1100 = vdwg.mxu0
      %v1101 = vpack.c.bf16 %v1082, %v1079
      %v1102 = vpack.c.bf16 %v1090, %v1087
      %v1103 = vpack.c.bf16 %v1098, %v1095
      %v1105 = vsel %vm774, %v1101, 0
      %v1108 = vsel %vm774, %v1102, 0
      %v1111 = vsel %vm774, %v1103, 0
      %1113 = vmatprep.subr.bf16.mxu0 0
      %1114 = vmatpush1.bf16.msra.mxu0 %v785
      %1115 = vmatprep.subr.bf16.mxu0 0
      %1116 = vmatpush1.bf16.msra.mxu0 0
      %1117 = vmatprep.subr.bf16.mxu0 0
      %1118 = vmatpush1.bf16.msra.mxu0 0
      %1119 = vmatprep.subr.bf16.mxu0 0
      %1120 = vmatpush1.bf16.msra.mxu0 0
      %1121 = vmatprep.subr.bf16.mxu0 0
      %1122 = vmatpush1.bf16.msra.mxu0 0
      %1123 = vmatprep.subr.bf16.mxu0 0
      %1124 = vmatpush1.bf16.msra.mxu0 0
      %1125 = vmatprep.subr.bf16.mxu0 0
      %1126 = vmatpush1.bf16.msra.mxu0 0
      %1127 = vmatprep.subr.bf16.mxu0 0
      %1128 = vmatpush1.bf16.msra.mxu0 0
      %1129 = vmatprep.subr.bf16.mxu0 0
      %1130 = vmatpush1.bf16.msra.mxu0 0
      %1131 = vmatprep.subr.bf16.mxu0 0
      %1132 = vmatpush1.bf16.msra.mxu0 0
      %1133 = vmatprep.subr.bf16.mxu0 0
      %1134 = vmatpush1.bf16.msra.mxu0 0
      %1135 = vmatprep.subr.bf16.mxu0 0
      %1136 = vmatpush1.bf16.msra.mxu0 0
      %1137 = vmatprep.subr.bf16.mxu0 0
      %1138 = vmatpush1.bf16.msra.mxu0 0
      %1139 = vmatprep.subr.bf16.mxu0 0
      %1140 = vmatpush1.bf16.msra.mxu0 0
      %1141 = vmatprep.subr.bf16.mxu0 0
      %1142 = vmatpush1.bf16.msra.mxu0 0
      %1143 = vmatprep.subr.bf16.mxu0 0
      %1144 = vmatpush1.bf16.msra.mxu0 0
      %1145 = vmatprep.mubr.bf16.mxu0 0
      %1146 = vmatmul.mubr.bf16.gmra.mrb[0].mxu0 %v1105
      %v1147 = vpop.f32.mrb[0].mxu0
      %v1148 = vadd.f32 0.0, %v1147
      %v1149 = vpop.f32.mrb[0].mxu0
      %v1150 = vpop.f32.mrb[0].mxu0
      %v1151 = vadd.f32 0.0, %v1150
      %v1152 = vpop.f32.mrb[0].mxu0
      %1153 = vmatprep.mubr.bf16.mxu0 0
      %1154 = vmatmul.mubr.bf16.gmra.mrb[0].mxu0 %v1108
      %v1155 = vpop.f32.mrb[0].mxu0
      %v1156 = vadd.f32 0.0, %v1155
      %v1157 = vpop.f32.mrb[0].mxu0
      %v1158 = vpop.f32.mrb[0].mxu0
      %v1159 = vadd.f32 0.0, %v1158
      %v1160 = vpop.f32.mrb[0].mxu0
      %1161 = vmatprep.mubr.bf16.mxu0 0
      %1162 = vmatmul.mubr.bf16.gmra.mrb[0].mxu0 %v1111
      %v1163 = vpop.f32.mrb[0].mxu0
      %v1164 = vadd.f32 0.0, %v1163
      %v1165 = vpop.f32.mrb[0].mxu0
      %v1166 = vpop.f32.mrb[0].mxu0
      %v1167 = vadd.f32 0.0, %v1166
      %v1168 = vpop.f32.mrb[0].mxu0
      %1169 = vdwg.mxu0
      %1176 = vrot.lane.b32.xlu0 %v1148, 16
      %v1177 = vpop.permute.xlu0 %1176
      %1178 = vrot.lane.b32.xlu0 %v1151, 16
      %v1179 = vpop.permute.xlu0 %1178
      %1180 = vrot.lane.b32.xlu0 %v1156, 16
      %v1181 = vpop.permute.xlu0 %1180
      %1182 = vrot.lane.b32.xlu0 %v1159, 16
      %v1183 = vpop.permute.xlu0 %1182
      %1184 = vrot.lane.b32.xlu0 %v1164, 16
      %v1185 = vpop.permute.xlu0 %1184
      %1186 = vrot.lane.b32.xlu0 %v1167, 16
      %v1187 = vpop.permute.xlu0 %1186
      %1194 = vrot.lane.b32.xlu0 %v1148, 32
      %v1195 = vpop.permute.xlu0 %1194
      %1196 = vrot.lane.b32.xlu0 %v1151, 32
      %v1197 = vpop.permute.xlu0 %1196
      %1198 = vrot.lane.b32.xlu0 %v1156, 32
      %v1199 = vpop.permute.xlu0 %1198
      %1200 = vrot.lane.b32.xlu0 %v1159, 32
      %v1201 = vpop.permute.xlu0 %1200
      %1202 = vrot.lane.b32.xlu0 %v1164, 32
      %v1203 = vpop.permute.xlu0 %1202
      %1204 = vrot.lane.b32.xlu0 %v1167, 32
      %v1205 = vpop.permute.xlu0 %1204
      %1212 = vrot.lane.b32.xlu0 %v1148, 48
      %v1213 = vpop.permute.xlu0 %1212
      %1214 = vrot.lane.b32.xlu0 %v1151, 48
      %v1215 = vpop.permute.xlu0 %1214
      %1216 = vrot.lane.b32.xlu0 %v1156, 48
      %v1217 = vpop.permute.xlu0 %1216
      %1218 = vrot.lane.b32.xlu0 %v1159, 48
      %v1219 = vpop.permute.xlu0 %1218
      %1220 = vrot.lane.b32.xlu0 %v1164, 48
      %v1221 = vpop.permute.xlu0 %1220
      %1222 = vrot.lane.b32.xlu0 %v1167, 48
      %v1223 = vpop.permute.xlu0 %1222
      %1230 = vrot.lane.b32.xlu0 %v1148, 64
      %v1231 = vpop.permute.xlu0 %1230
      %1232 = vrot.lane.b32.xlu0 %v1151, 64
      %v1233 = vpop.permute.xlu0 %1232
      %1234 = vrot.lane.b32.xlu0 %v1156, 64
      %v1235 = vpop.permute.xlu0 %1234
      %1236 = vrot.lane.b32.xlu0 %v1159, 64
      %v1237 = vpop.permute.xlu0 %1236
      %1238 = vrot.lane.b32.xlu0 %v1164, 64
      %v1239 = vpop.permute.xlu0 %1238
      %1240 = vrot.lane.b32.xlu0 %v1167, 64
      %v1241 = vpop.permute.xlu0 %1240
      %1248 = vrot.lane.b32.xlu0 %v1148, 80
      %v1249 = vpop.permute.xlu0 %1248
      %1250 = vrot.lane.b32.xlu0 %v1151, 80
      %v1251 = vpop.permute.xlu0 %1250
      %1252 = vrot.lane.b32.xlu0 %v1156, 80
      %v1253 = vpop.permute.xlu0 %1252
      %1254 = vrot.lane.b32.xlu0 %v1159, 80
      %v1255 = vpop.permute.xlu0 %1254
      %1256 = vrot.lane.b32.xlu0 %v1164, 80
      %v1257 = vpop.permute.xlu0 %1256
      %1258 = vrot.lane.b32.xlu0 %v1167, 80
      %v1259 = vpop.permute.xlu0 %1258
      %1266 = vrot.lane.b32.xlu0 %v1148, 96
      %v1267 = vpop.permute.xlu0 %1266
      %1268 = vrot.lane.b32.xlu0 %v1151, 96
      %v1269 = vpop.permute.xlu0 %1268
      %1270 = vrot.lane.b32.xlu0 %v1156, 96
      %v1271 = vpop.permute.xlu0 %1270
      %1272 = vrot.lane.b32.xlu0 %v1159, 96
      %v1273 = vpop.permute.xlu0 %1272
      %1274 = vrot.lane.b32.xlu0 %v1164, 96
      %v1275 = vpop.permute.xlu0 %1274
      %1276 = vrot.lane.b32.xlu0 %v1167, 96
      %v1277 = vpop.permute.xlu0 %1276
      %1284 = vrot.lane.b32.xlu0 %v1148, 112
      %v1285 = vpop.permute.xlu0 %1284
      %1286 = vrot.lane.b32.xlu0 %v1151, 112
      %v1287 = vpop.permute.xlu0 %1286
      %1288 = vrot.lane.b32.xlu0 %v1156, 112
      %v1289 = vpop.permute.xlu0 %1288
      %1290 = vrot.lane.b32.xlu0 %v1159, 112
      %v1291 = vpop.permute.xlu0 %1290
      %1292 = vrot.lane.b32.xlu0 %v1164, 112
      %v1293 = vpop.permute.xlu0 %1292
      %1294 = vrot.lane.b32.xlu0 %v1167, 112
      %v1295 = vpop.permute.xlu0 %1294
      %v1302 = vsel %vm976, %v1148, %v1177
      %v1303 = vsel %vm976, %v1151, %v1179
      %v1304 = vsel %vm976, %v1156, %v1181
      %v1305 = vsel %vm976, %v1159, %v1183
      %v1306 = vsel %vm976, %v1164, %v1185
      %v1307 = vsel %vm976, %v1167, %v1187
      %v1308 = vsel %vm983, %v1302, %v1195
      %v1309 = vsel %vm983, %v1303, %v1197
      %v1310 = vsel %vm983, %v1304, %v1199
      %v1311 = vsel %vm983, %v1305, %v1201
      %v1312 = vsel %vm983, %v1306, %v1203
      %v1313 = vsel %vm983, %v1307, %v1205
      %v1314 = vsel %vm990, %v1308, %v1213
      %v1315 = vsel %vm990, %v1309, %v1215
      %v1316 = vsel %vm990, %v1310, %v1217
      %v1317 = vsel %vm990, %v1311, %v1219
      %v1318 = vsel %vm990, %v1312, %v1221
      %v1319 = vsel %vm990, %v1313, %v1223
      %v1320 = vsel %vm997, %v1314, %v1231
      %v1321 = vsel %vm997, %v1315, %v1233
      %v1322 = vsel %vm997, %v1316, %v1235
      %v1323 = vsel %vm997, %v1317, %v1237
      %v1324 = vsel %vm997, %v1318, %v1239
      %v1325 = vsel %vm997, %v1319, %v1241
      %v1326 = vsel %vm1004, %v1320, %v1249
      %v1327 = vsel %vm1004, %v1321, %v1251
      %v1328 = vsel %vm1004, %v1322, %v1253
      %v1329 = vsel %vm1004, %v1323, %v1255
      %v1330 = vsel %vm1004, %v1324, %v1257
      %v1331 = vsel %vm1004, %v1325, %v1259
      %v1332 = vsel %vm1011, %v1326, %v1267
      %v1333 = vsel %vm1011, %v1327, %v1269
      %v1334 = vsel %vm1011, %v1328, %v1271
      %v1335 = vsel %vm1011, %v1329, %v1273
      %v1336 = vsel %vm1011, %v1330, %v1275
      %v1337 = vsel %vm1011, %v1331, %v1277
      %v1338 = vsel %vm1018, %v1332, %v1285
      %v1339 = vsel %vm1018, %v1333, %v1287
      %v1340 = vsel %vm1018, %v1334, %v1289
      %v1341 = vsel %vm1018, %v1335, %v1291
      %v1342 = vsel %vm1018, %v1336, %v1293
      %v1343 = vsel %vm1018, %v1337, %v1295
      %v1344 = vadd.f32 %v637, %v1019
      %v1345 = vadd.f32 %v639, %v1338
      %v1346 = vadd.f32 %v641, %v1020
      %v1347 = vadd.f32 %v643, %v1339
      %v1348 = vadd.f32 %v647, %v1021
      %v1349 = vadd.f32 %v649, %v1340
      %v1350 = vadd.f32 %v651, %v1022
      %v1351 = vadd.f32 %v653, %v1341
      %v1352 = vadd.f32 %v657, %v1023
      %v1353 = vadd.f32 %v659, %v1342
      %v1354 = vadd.f32 %v661, %v1024
      %v1355 = vadd.f32 %v663, %v1343
      %v1356 = vpack.c.bf16 %v1346, %v1344
      %v1357 = vpack.c.bf16 %v1347, %v1345
      %v1358 = vpack.c.bf16 %v1350, %v1348
      %v1359 = vpack.c.bf16 %v1351, %v1349
      %v1360 = vpack.c.bf16 %v1354, %v1352
      %v1361 = vpack.c.bf16 %v1355, %v1353
      %v1362 = vmul.bf16 %v1356, %v1356
      %v1363 = vmul.bf16 %v1357, %v1357
      %v1364 = vmul.bf16 %v1358, %v1358
      %v1365 = vmul.bf16 %v1359, %v1359
      %v1366 = vmul.bf16 %v1360, %v1360
      %v1367 = vmul.bf16 %v1361, %v1361
      %v1368 = vmul.bf16 %v1356, %v1362
      %v1369 = vmul.bf16 %v1357, %v1363
      %v1370 = vmul.bf16 %v1358, %v1364
      %v1371 = vmul.bf16 %v1359, %v1365
      %v1372 = vmul.bf16 %v1360, %v1366
      %v1373 = vmul.bf16 %v1361, %v1367
      %v1374 = vmul.bf16 %v1368, 1027030327
      %v1375 = vmul.bf16 %v1369, 1027030327
      %v1376 = vmul.bf16 %v1370, 1027030327
      %v1377 = vmul.bf16 %v1371, 1027030327
      %v1378 = vmul.bf16 %v1372, 1027030327
      %v1379 = vmul.bf16 %v1373, 1027030327
      %v1380 = vadd.bf16 %v1356, %v1374
      %v1381 = vadd.bf16 %v1357, %v1375
      %v1382 = vadd.bf16 %v1358, %v1376
      %v1383 = vadd.bf16 %v1359, %v1377
      %v1384 = vadd.bf16 %v1360, %v1378
      %v1385 = vadd.bf16 %v1361, %v1379
      %v1386 = vmul.bf16 %v1380, 1061961548
      %v1387 = vmul.bf16 %v1381, 1061961548
      %v1388 = vmul.bf16 %v1382, 1061961548
      %v1389 = vmul.bf16 %v1383, 1061961548
      %v1390 = vmul.bf16 %v1384, 1061961548
      %v1391 = vmul.bf16 %v1385, 1061961548
      %v1392 = vtanh.bf16.pop %v1386
      %v1393 = vtanh.bf16.pop %v1387
      %v1394 = vtanh.bf16.pop %v1388
      %v1395 = vtanh.bf16.pop %v1389
      %v1396 = vtanh.bf16.pop %v1390
      %v1397 = vtanh.bf16.pop %v1391
      %v1398 = vadd.bf16 %v1392, 1065369472
      %v1399 = vadd.bf16 %v1393, 1065369472
      %v1400 = vadd.bf16 %v1394, 1065369472
      %v1401 = vadd.bf16 %v1395, 1065369472
      %v1402 = vadd.bf16 %v1396, 1065369472
      %v1403 = vadd.bf16 %v1397, 1065369472
      %v1404 = vmul.bf16 %v1398, 1056980736
      %v1405 = vmul.bf16 %v1399, 1056980736
      %v1406 = vmul.bf16 %v1400, 1056980736
      %v1407 = vmul.bf16 %v1401, 1056980736
      %v1408 = vmul.bf16 %v1402, 1056980736
      %v1409 = vmul.bf16 %v1403, 1056980736
      %v1410 = vmul.bf16 %v1356, %v1404
      %v1411 = vmul.bf16 %v1357, %v1405
      %v1412 = vmul.bf16 %v1358, %v1406
      %v1413 = vmul.bf16 %v1359, %v1407
      %v1414 = vmul.bf16 %v1360, %v1408
      %v1415 = vmul.bf16 %v1361, %v1409
      %v1416 = vld [vmem:[%s7] sm:$0xf]
      %v1417 = vld [vmem:[%s7 + $0x4] sm:$0xf]
      %v1418 = vld [vmem:[%s7 + $0x8] sm:$0xf]
      %v1419 = vld [vmem:[%s7 + $0xc] sm:$0xf]
      %v1420 = vunpack.c.l.bf16 %v431
      %v1421 = vunpack.c.h.bf16 %v431
      %v1422 = vunpack.c.l.bf16 %v432
      %v1423 = vunpack.c.h.bf16 %v432
      %v1424 = vunpack.c.l.bf16 %v433
      %v1425 = vunpack.c.h.bf16 %v433
      %v1426 = vunpack.c.l.bf16 %v434
      %v1427 = vunpack.c.h.bf16 %v434
      %v1432 = vunpack.c.l.b16 %v1416
      %v1433 = vunpack.c.l.b16 %v1417
      %v1434 = vunpack.c.l.b16 %v1418
      %v1435 = vunpack.c.l.b16 %v1419
      %v1436 = vpack.c.b16 %v1433, %v1432
      %v1437 = vpack.c.b16 %v1435, %v1434
      %v1439 = vsel %vm990, %v1436, 0
      %v1442 = vsel %vm990, %v1437, 0
      %1444 = vmatprep.subr.bf16.mxu0 %v1411
      %1445 = vmatpush1.bf16.msra.mxu0 %v1410
      %1446 = vmatprep.subr.bf16.mxu0 %v1413
      %1447 = vmatpush1.bf16.msra.mxu0 %v1412
      %1448 = vmatprep.subr.bf16.mxu0 %v1415
      %1449 = vmatpush1.bf16.msra.mxu0 %v1414
      %1450 = vmatprep.subr.bf16.mxu0 0
      %1451 = vmatpush1.bf16.msra.mxu0 0
      %1452 = vmatprep.subr.bf16.mxu0 0
      %1453 = vmatpush1.bf16.msra.mxu0 0
      %1454 = vmatprep.subr.bf16.mxu0 0
      %1455 = vmatpush1.bf16.msra.mxu0 0
      %1456 = vmatprep.subr.bf16.mxu0 0
      %1457 = vmatpush1.bf16.msra.mxu0 0
      %1458 = vmatprep.subr.bf16.mxu0 0
      %1459 = vmatpush1.bf16.msra.mxu0 0
      %1460 = vmatprep.subr.bf16.mxu0 0
      %1461 = vmatpush1.bf16.msra.mxu0 0
      %1462 = vmatprep.subr.bf16.mxu0 0
      %1463 = vmatpush1.bf16.msra.mxu0 0
      %1464 = vmatprep.subr.bf16.mxu0 0
      %1465 = vmatpush1.bf16.msra.mxu0 0
      %1466 = vmatprep.subr.bf16.mxu0 0
      %1467 = vmatpush1.bf16.msra.mxu0 0
      %1468 = vmatprep.subr.bf16.mxu0 0
      %1469 = vmatpush1.bf16.msra.mxu0 0
      %1470 = vmatprep.subr.bf16.mxu0 0
      %1471 = vmatpush1.bf16.msra.mxu0 0
      %1472 = vmatprep.subr.bf16.mxu0 0
      %1473 = vmatpush1.bf16.msra.mxu0 0
      %1474 = vmatprep.subr.bf16.mxu0 0
      %1475 = vmatpush1.bf16.msra.mxu0 0
      %1476 = vmatprep.mubr.bf16.mxu0 0
      %1477 = vmatmul.mubr.bf16.gmra.mrb[0].mxu0 %v1439
      %v1478 = vpop.f32.mrb[0].mxu0
      %v1479 = vadd.f32 %v1420, %v1478
      %v1480 = vpop.f32.mrb[0].mxu0
      %v1481 = vadd.f32 %v1421, %v1480
      %v1482 = vpop.f32.mrb[0].mxu0
      %v1483 = vadd.f32 %v1422, %v1482
      %v1484 = vpop.f32.mrb[0].mxu0
      %v1485 = vadd.f32 %v1423, %v1484
      %1486 = vmatprep.mubr.bf16.mxu0 0
      %1487 = vmatmul.mubr.bf16.gmra.mrb[0].mxu0 %v1442
      %v1488 = vpop.f32.mrb[0].mxu0
      %v1489 = vadd.f32 %v1424, %v1488
      %v1490 = vpop.f32.mrb[0].mxu0
      %v1491 = vadd.f32 %v1425, %v1490
      %v1492 = vpop.f32.mrb[0].mxu0
      %v1493 = vadd.f32 %v1426, %v1492
      %v1494 = vpop.f32.mrb[0].mxu0
      %v1495 = vadd.f32 %v1427, %v1494
      %1496 = vdwg.mxu0
      %v1497 = vpack.c.bf16 %v1483, %v1479
      %v1498 = vpack.c.bf16 %v1485, %v1481
      %v1499 = vpack.c.bf16 %v1493, %v1489
      %v1500 = vpack.c.bf16 %v1495, %v1491
      %v1505 = vunpack.c.l.b16 %v1497
      %v1506 = vunpack.c.l.b16 %v1498
      %v1507 = vunpack.c.h.b16 %v1497
      %v1508 = vunpack.c.h.b16 %v1498
      %v1509 = vunpack.c.l.b16 %v1499
      %v1510 = vunpack.c.l.b16 %v1500
      %v1511 = vunpack.c.h.b16 %v1499
      %v1512 = vunpack.c.h.b16 %v1500
      %v1513 = vpack.c.b16 %v1506, %v1505
      %v1514 = vpack.c.b16 %v1508, %v1507
      %v1515 = vpack.c.b16 %v1510, %v1509
      %v1516 = vpack.c.b16 %v1512, %v1511
      %1521 = vst [vmem:[%s418] sm:$0xff] %v1513
      %1522 = vst [vmem:[%s418 + $0x8] sm:$0xff] %v1514
      %1523 = vst [vmem:[%s418 + $0x10] sm:$0xff] %v1515
      %vm1524 = vcmask 1043456
      %vm1525 = vsmask.f32 3328
      %vm1526 = vmand %vm1524, %vm1525
      %vm1527 = vcmask 1047556
      %vm1528 = vsmask.f32 7424
      %vm1529 = vmand %vm1527, %vm1528
      %vm1530 = vmor %vm1529, %vm1526
      %v1531 = vld [vmem:[%s418 + $0x18] sm:$0xff]
      %v1532 = vsel %vm1530, %v1516, %v1531
      %1533 = vst [vmem:[%s418 + $0x18] sm:$0xff] %v1532
      %s1534 = smul.u32 2, %s24
      %p1535 = scmp.lt.s32.totalorder %s23, 1
      %s1536 = scalar_select %p1535, %s23, 1
      %p1537 = scmp.lt.s32.totalorder %s1534, 1
      %s1538 = scalar_select %p1537, %s1534, 1
      %s1539 = smul.addr %s1536, 8
      %s1540 = sadd.s32 %s1538, %s1539
      %s1541 = smul.addr %s1540, 4
      %s1542 = scalar_lea.vmem %s8, %s1541
      // Predicated region
      $region53: #{bidinet_forward.1} parent=51 // pred_check
        %p1543 = pneg %p240
      $region54: #{bidinet_forward.1} parent=51 // pred_check_branch
        %1545 = sbr.rel (%p1543) target = $region56
      $region55: #{bidinet_forward.1} parent=51 // pred_region
        %s1546 = smul.u32 2, %s24
      $region56: #{bidinet_forward.1} parent=51 // pred_fallthru
        _
    $region52: #{bidinet_forward.1} parent=5 // pred_fallthru
      _
    %p1547 = scmp.le.s32.totalorder 2, %s14
    // Predicated region
    $region57: #{bidinet_forward.1} parent=5 // pred_check
      %p1548 = pneg %p1547
    $region58: #{bidinet_forward.1} parent=5 // pred_check_branch
      %1550 = sbr.rel (%p1548) target = $region60
    $region59: #{bidinet_forward.1} parent=5 // pred_region
      %s1551 = ssub.s32 %s14, 2
      // Predicated region
      $region61: #{bidinet_forward.1} parent=59 // pred_check
        %p1552 = pneg %p246
      $region62: #{bidinet_forward.1} parent=59 // pred_check_branch
        %1554 = sbr.rel (%p1552) target = $region64
      $region63: #{bidinet_forward.1} parent=59 // pred_region
        %s1555 = smul.u32 2, %s26
        %p1556 = scmp.lt.s32.totalorder %s25, 1
        %s1557 = scalar_select %p1556, %s25, 1
        %p1558 = scmp.lt.s32.totalorder %s1555, 1
        %s1559 = scalar_select %p1558, %s1555, 1
        %s1560 = smul.addr %s1557, 8
        %s1561 = sadd.s32 %s1559, %s1560
        %s1562 = smul.addr %s1561, 4
        %s1563 = scalar_lea.vmem %s8, %s1562
      $region64: #{bidinet_forward.1} parent=59 // pred_fallthru
        _
    $region60: #{bidinet_forward.1} parent=5 // pred_fallthru
      _
  $region6: #{bidinet_forward.1} parent=0 // loop_footer
    %s18 = sadd.s32 1, %s14
  $region7: #{bidinet_forward.1} parent=0 // loop_footer_branch
    %13 = sbr.rel target = $region3
  $region8: #{bidinet_forward.1} parent=0 // loop_exit
    _

</llo_original>
